<compile_context>
chip_gen: v5e
topology: v5e:2x2
jax: 0.10.0
libtpu: 0.0.40
codegen_flags: <defaults>
</compile_context>

<pallas_src>
import functools

import jax
import jax.numpy as jnp
import numpy as np
from jax.experimental import pallas as pl
from jax.experimental.pallas import tpu as pltpu

_VPU_MIX_MAX = 8  # contraction dims <= this are done on the VPU, not the MXU


# ----------------------------------------------------------------------------
# Parameter packing: ONE flat 2-D f32 array + static unpack metadata.
# (numpy, done once at init time -> no per-call kron/transpose XLA ops)
# ----------------------------------------------------------------------------
def pack_gigo_params(params, Ki, Ko):
    Si = np.asarray(params["Si"], np.float32)
    So = np.asarray(params["So"], np.float32)
    Ni, No = Si.shape[0], So.shape[0]
    gfi, gfo, conv = params["gfi"], params["gfo"], params["conv"]
    if gfi:  # required by the in-kernel permute (review correctness concern)
        assert gfi[-1][0].shape[1] == No, "Fi[-1] must equal No"
    if gfo:
        assert gfo[0][0].shape[2] == Ni, "Fo[0] must equal Ni"

    blocks, row = [], [0]

    def add(arr):
        arr = np.ascontiguousarray(np.asarray(arr, np.float32))
        r0 = row[0]
        blocks.append((r0, arr))
        row[0] = -(-(r0 + arr.shape[0]) // 8) * 8          # 8-row aligned starts
        return int(r0)

    def power_stack(S, K):
        """[ (S^T)^1 | (S^T)^2 | ... | (S^T)^(K-1) ]  shape (N, (K-1)*N)."""
        St = np.ascontiguousarray(S.T)
        cur, mats = np.eye(S.shape[0], dtype=np.float32), []
        for _ in range(1, K):
            cur = cur @ St
            mats.append(cur.copy())
        return np.concatenate(mats, axis=1)

    spi_r0 = add(power_stack(Si, Ki)) if Ki > 1 else 0
    spo_r0 = add(power_stack(So, Ko)) if Ko > 1 else 0

    def add_graph_filter(w, b, K):
        w = np.asarray(w, np.float32)                       # (K, Fout, Fin)
        _, Fout, Fin = w.shape
        w_stack = np.concatenate([w[k] for k in range(K)], axis=1)   # (Fout, K*Fin)
        wr = add(w_stack)
        br = add(np.reshape(np.asarray(b, np.float32), (Fout, 1)))
        return (wr, br, int(Fout), int(Fin))

    gfi_meta = tuple(add_graph_filter(w, b, Ki) for (w, b) in gfi)
    gfo_meta = tuple(add_graph_filter(w, b, Ko) for (w, b) in gfo)

    conv_meta = []
    for (w, b) in conv:
        w = np.asarray(w, np.float32)                       # (Cout, Cin)
        wr = add(w)
        br = add(np.reshape(np.asarray(b, np.float32), (w.shape[0], 1)))
        conv_meta.append((wr, br, int(w.shape[0]), int(w.shape[1])))

    cols = max(a.shape[1] for (_, a) in blocks)
    pack = np.zeros((row[0], cols), np.float32)
    for (r0, a) in blocks:
        pack[r0:r0 + a.shape[0], :a.shape[1]] = a

    meta = dict(Ni=int(Ni), No=int(No), Ki=int(Ki), Ko=int(Ko),
                spi_r0=spi_r0, spo_r0=spo_r0,
                gfi=gfi_meta, gfo=gfo_meta, conv=tuple(conv_meta))
    return dict(pack=jnp.asarray(pack), meta=meta)


# ----------------------------------------------------------------------------
# Fused Pallas kernel: whole GIGO forward for the whole batch, one invocation.
# ----------------------------------------------------------------------------
def fused_gigo_kernel(x_ref, p_ref, o_ref, *, T, meta):
    Ni, No, Ki, Ko = meta["Ni"], meta["No"], meta["Ki"], meta["Ko"]

    def pblk(r0, rows, cols):                    # static slice of the param pack
        return p_ref[r0:r0 + rows, :cols]

    def fold(y, N):
        # slab (F, T*N), t-major lanes -> (T*F, N), rows ordered (t, f)
        return jnp.concatenate([y[:, t * N:(t + 1) * N] for t in range(T)], axis=0)

    def unfold(z, F):
        # (T*F, N), rows (t, f) -> slab (F, T*N), t-major lanes
        return jnp.concatenate([z[t * F:(t + 1) * F, :] for t in range(T)], axis=1)

    def mix(W, z, b, cdim):
        # W: (Fout, cdim), z: (cdim, L), b: (Fout, 1)
        if cdim <= _VPU_MIX_MAX:
            # tiny contraction: VPU broadcast-multiply-adds (skip MXU latency)
            out = W[:, 0:1] * z[0:1, :]
            for c in range(1, cdim):
                out = out + W[:, c:c + 1] * z[c:c + 1, :]
        else:
            out = jnp.dot(W, z, preferred_element_type=jnp.float32)
        return jnp.tanh(out + b)

    def gf_layer(y, sp_r0, N, K, wr, br, Fout, Fin):
        # y: (Fin, T*N) slab.  One shift matmul for all taps + one feature mix.
        taps = [y]
        if K > 1:
            SPt = pblk(sp_r0, N, (K - 1) * N)               # [S^T | ... | (S^T)^(K-1)]
            yr = fold(y, N)                                  # (T*Fin, N)
            zr = jnp.dot(yr, SPt, preferred_element_type=jnp.float32)  # (T*Fin,(K-1)*N)
            for k in range(1, K):
                taps.append(unfold(zr[:, (k - 1) * N:k * N], Fin))
        z = taps[0] if K == 1 else jnp.concatenate(taps, axis=0)        # (K*Fin, T*N)
        return mix(pblk(wr, Fout, K * Fin), z, pblk(br, Fout, 1), K * Fin)

    # --- fold input (T, F0, Ni) -> slab (F0, T*Ni), t-major lanes -------------
    y = jnp.concatenate([x_ref[t].astype(jnp.float32) for t in range(T)], axis=1)

    # --- GFLi: graph filters on the input graph (nodes = Ni) ------------------
    for (wr, br, Fout, Fin) in meta["gfi"]:
        y = gf_layer(y, meta["spi_r0"], Ni, Ki, wr, br, Fout, Fin)

    # --- permute(0, 2, 1): slab (No, T*Ni) -> (Ni, T*No) ----------------------
    # one full 2-D transpose (rows become (t, ni)) + one lane re-pack
    y = unfold(y.T, Ni)

    # --- GFLo: graph filters on the output graph (nodes = No) -----------------
    for (wr, br, Fout, Fin) in meta["gfo"]:
        y = gf_layer(y, meta["spo_r0"], No, Ko, wr, br, Fout, Fin)

    # --- 1x1 conv stack (tanh after every conv, per the reference loop) -------
    for (wr, br, Cout, Cin) in meta["conv"]:
        y = mix(pblk(wr, Cout, Cin), y, pblk(br, Cout, 1), Cin)

    # --- unfold output slab (Cout, T*No) -> (T, Cout, No) ---------------------
    for t in range(T):
        o_ref[t] = y[:, t * No:(t + 1) * No]


def gigo_forward(x, packed):
    """x: (T, Fi[0], Ni) -> (T, C[-1], No).  Wrapper == the pallas_call, nothing else."""
    meta = packed["meta"]
    T = int(x.shape[0])
    No = meta["No"]
    if meta["conv"]:
        Cout = meta["conv"][-1][2]
    elif meta["gfo"]:
        Cout = meta["gfo"][-1][2]
    else:
        Cout = meta["Ni"]

    kernel = functools.partial(fused_gigo_kernel, T=T, meta=meta)
    return pl.pallas_call(
        kernel,
        out_shape=jax.ShapeDtypeStruct((T, Cout, No), jnp.float32),
        in_specs=[pl.BlockSpec(memory_space=pltpu.MemorySpace.VMEM),
                  pl.BlockSpec(memory_space=pltpu.MemorySpace.VMEM)],
        out_specs=pl.BlockSpec(memory_space=pltpu.MemorySpace.VMEM),
        compiler_params=pltpu.CompilerParams(vmem_limit_bytes=16 * 1024 * 1024),
    )(x, packed["pack"])


# ----------------------------------------------------------------------------
# Parameter construction (deterministic, in-script)
# ----------------------------------------------------------------------------
def _shift_operator(key, n):
    a = (jax.random.uniform(key, (n, n)) > 0.5).astype(jnp.float32)
    a = jnp.triu(a, 1)
    a = a + a.T                                  # symmetric, zero diagonal
    return a / (jnp.max(jnp.sum(a, axis=1)) + 1.0)


def init_gigo_params(key, Ni, No, Fi, Fo, Ki, Ko, C):
    assert Fi[-1] == No and Fo[0] == Ni and (len(C) == 0 or Fo[-1] == C[0])
    keys = iter(jax.random.split(key, 64))
    Si = _shift_operator(next(keys), Ni)
    So = _shift_operator(next(keys), No)

    gfi = []
    for l in range(len(Fi) - 1):
        w = 0.1 * jax.random.normal(next(keys), (Ki, Fi[l + 1], Fi[l]), jnp.float32)
        b = 0.1 * jax.random.normal(next(keys), (Fi[l + 1], 1), jnp.float32)
        gfi.append((w, b))

    gfo = []
    for l in range(len(Fo) - 1):
        w = 0.1 * jax.random.normal(next(keys), (Ko, Fo[l + 1], Fo[l]), jnp.float32)
        b = 0.1 * jax.random.normal(next(keys), (Fo[l + 1], 1), jnp.float32)
        gfo.append((w, b))

    conv = []
    for c in range(len(C) - 1):
        w = 0.1 * jax.random.normal(next(keys), (C[c + 1], C[c]), jnp.float32)
        b = 0.1 * jax.random.normal(next(keys), (C[c + 1], 1), jnp.float32)
        conv.append((w, b))

    return dict(Si=Si, So=So, gfi=gfi, gfo=gfo, conv=conv)


# ----------------------------------------------------------------------------
# Pure-JAX reference (correctness check)
# ----------------------------------------------------------------------------
def _graph_filter_ref(x, S, W, b, apply_tanh=True):
    K = W.shape[0]
    xk = x
    acc = jnp.zeros((x.shape[0], W.shape[1], x.shape[2]), jnp.float32)
    for k in range(K):
        acc = acc + jnp.einsum("gf,tfn->tgn", W[k], xk)
        xk = jnp.einsum("nm,tfm->tfn", S, xk)
    acc = acc + b[None]
    return jnp.tanh(acc) if apply_tanh else acc


if __name__ == "__main__":
    key = jax.random.PRNGKey(0)
    Ni, No = 16, 8                # input / output graph sizes
    Fi = [2, 4, No]               # Fi[-1] == No
    Fo = [Ni, 4, 4]               # Fo[0] == Ni, Fo[-1] == C[0]
    C = [4, 8, 2]
    Ki, Ko = 3, 2
    T = 8                         # batch; T*Ni = 128 -> lane-dense GFLi slab

    kp, kx = jax.random.split(key)
    params = init_gigo_params(kp, Ni, No, Fi, Fo, Ki, Ko, C)
    packed = pack_gigo_params(params, Ki, Ko)       # one-time, numpy
    x = jax.random.normal(kx, (T, Fi[0], Ni), jnp.float32)   # (T, Fin, Ni)

    out = jax.block_until_ready(gigo_forward(x, packed))
    assert out.shape == (T, C[-1], No), out.shape

    # reference check (plain JAX, layer by layer)
    ref = x
    for (w, b) in params["gfi"]:
        ref = _graph_filter_ref(ref, params["Si"], w, b)
    ref = jnp.transpose(ref, (0, 2, 1))
    for (w, b) in params["gfo"]:
        ref = _graph_filter_ref(ref, params["So"], w, b)
    for (w, b) in params["conv"]:
        ref = _graph_filter_ref(ref, jnp.eye(No, dtype=jnp.float32), w[None], b)
    np.testing.assert_allclose(np.asarray(out), np.asarray(ref), rtol=1e-5, atol=1e-5)

    print("KERNEL_OK")
</pallas_src>

<mosaic_0001>
module attributes {stable_mosaic.version = 11 : i64} {
  func.func @fused_gigo_kernel(%arg0: memref<8x2x16xf32, #tpu.memory_space<vmem>>, %arg1: memref<120x32xf32, #tpu.memory_space<vmem>>, %arg2: memref<8x2x8xf32, #tpu.memory_space<vmem>>) attributes {dimension_semantics = [], scalar_prefetch = 0 : i64, scratch_operands = 0 : i64, tpu.core_type = #tpu.core_type<tc>} {
    %c0 = arith.constant 0 : index
    %c0_0 = arith.constant 0 : index
    %c0_1 = arith.constant 0 : index
    %0 = vector.load %arg0[%c0, %c0_0, %c0_1] : memref<8x2x16xf32, #tpu.memory_space<vmem>>, vector<1x2x16xf32>
    %1 = vector.shape_cast %0 : vector<1x2x16xf32> to vector<2x16xf32>
    %c1 = arith.constant 1 : index
    %c0_2 = arith.constant 0 : index
    %c0_3 = arith.constant 0 : index
    %2 = vector.load %arg0[%c1, %c0_2, %c0_3] : memref<8x2x16xf32, #tpu.memory_space<vmem>>, vector<1x2x16xf32>
    %3 = vector.shape_cast %2 : vector<1x2x16xf32> to vector<2x16xf32>
    %c2 = arith.constant 2 : index
    %c0_4 = arith.constant 0 : index
    %c0_5 = arith.constant 0 : index
    %4 = vector.load %arg0[%c2, %c0_4, %c0_5] : memref<8x2x16xf32, #tpu.memory_space<vmem>>, vector<1x2x16xf32>
    %5 = vector.shape_cast %4 : vector<1x2x16xf32> to vector<2x16xf32>
    %c3 = arith.constant 3 : index
    %c0_6 = arith.constant 0 : index
    %c0_7 = arith.constant 0 : index
    %6 = vector.load %arg0[%c3, %c0_6, %c0_7] : memref<8x2x16xf32, #tpu.memory_space<vmem>>, vector<1x2x16xf32>
    %7 = vector.shape_cast %6 : vector<1x2x16xf32> to vector<2x16xf32>
    %c4 = arith.constant 4 : index
    %c0_8 = arith.constant 0 : index
    %c0_9 = arith.constant 0 : index
    %8 = vector.load %arg0[%c4, %c0_8, %c0_9] : memref<8x2x16xf32, #tpu.memory_space<vmem>>, vector<1x2x16xf32>
    %9 = vector.shape_cast %8 : vector<1x2x16xf32> to vector<2x16xf32>
    %c5 = arith.constant 5 : index
    %c0_10 = arith.constant 0 : index
    %c0_11 = arith.constant 0 : index
    %10 = vector.load %arg0[%c5, %c0_10, %c0_11] : memref<8x2x16xf32, #tpu.memory_space<vmem>>, vector<1x2x16xf32>
    %11 = vector.shape_cast %10 : vector<1x2x16xf32> to vector<2x16xf32>
    %c6 = arith.constant 6 : index
    %c0_12 = arith.constant 0 : index
    %c0_13 = arith.constant 0 : index
    %12 = vector.load %arg0[%c6, %c0_12, %c0_13] : memref<8x2x16xf32, #tpu.memory_space<vmem>>, vector<1x2x16xf32>
    %13 = vector.shape_cast %12 : vector<1x2x16xf32> to vector<2x16xf32>
    %c7 = arith.constant 7 : index
    %c0_14 = arith.constant 0 : index
    %c0_15 = arith.constant 0 : index
    %14 = vector.load %arg0[%c7, %c0_14, %c0_15] : memref<8x2x16xf32, #tpu.memory_space<vmem>>, vector<1x2x16xf32>
    %15 = vector.shape_cast %14 : vector<1x2x16xf32> to vector<2x16xf32>
    %16 = tpu.concatenate %1, %3, %5, %7, %9, %11, %13, %15 in 1 : vector<2x16xf32>, vector<2x16xf32>, vector<2x16xf32>, vector<2x16xf32>, vector<2x16xf32>, vector<2x16xf32>, vector<2x16xf32>, vector<2x16xf32> -> vector<2x128xf32>
    %c0_16 = arith.constant 0 : index
    %c0_17 = arith.constant 0 : index
    %17 = vector.load %arg1[%c0_16, %c0_17] : memref<120x32xf32, #tpu.memory_space<vmem>>, vector<16x32xf32>
    %18 = vector.extract_strided_slice %16 {offsets = [0, 0], sizes = [2, 16], strides = [1, 1]} : vector<2x128xf32> to vector<2x16xf32>
    %19 = vector.extract_strided_slice %16 {offsets = [0, 16], sizes = [2, 16], strides = [1, 1]} : vector<2x128xf32> to vector<2x16xf32>
    %20 = vector.extract_strided_slice %16 {offsets = [0, 32], sizes = [2, 16], strides = [1, 1]} : vector<2x128xf32> to vector<2x16xf32>
    %21 = vector.extract_strided_slice %16 {offsets = [0, 48], sizes = [2, 16], strides = [1, 1]} : vector<2x128xf32> to vector<2x16xf32>
    %22 = vector.extract_strided_slice %16 {offsets = [0, 64], sizes = [2, 16], strides = [1, 1]} : vector<2x128xf32> to vector<2x16xf32>
    %23 = vector.extract_strided_slice %16 {offsets = [0, 80], sizes = [2, 16], strides = [1, 1]} : vector<2x128xf32> to vector<2x16xf32>
    %24 = vector.extract_strided_slice %16 {offsets = [0, 96], sizes = [2, 16], strides = [1, 1]} : vector<2x128xf32> to vector<2x16xf32>
    %25 = vector.extract_strided_slice %16 {offsets = [0, 112], sizes = [2, 16], strides = [1, 1]} : vector<2x128xf32> to vector<2x16xf32>
    %26 = tpu.concatenate %18, %19, %20, %21, %22, %23, %24, %25 in 0 : vector<2x16xf32>, vector<2x16xf32>, vector<2x16xf32>, vector<2x16xf32>, vector<2x16xf32>, vector<2x16xf32>, vector<2x16xf32>, vector<2x16xf32> -> vector<16x16xf32>
    %cst = arith.constant dense<0.000000e+00> : vector<16x32xf32>
    %27 = tpu.matmul %26, %17, %cst {dimension_numbers = #tpu.dot_dimension_numbers<[1], [0], [0], [1], [0, 0, 1, 1], [], []>} : vector<16x16xf32>, vector<16x32xf32>, vector<16x32xf32> -> vector<16x32xf32>
    %28 = vector.extract_strided_slice %27 {offsets = [0, 0], sizes = [16, 16], strides = [1, 1]} : vector<16x32xf32> to vector<16x16xf32>
    %29 = vector.extract_strided_slice %28 {offsets = [0, 0], sizes = [2, 16], strides = [1, 1]} : vector<16x16xf32> to vector<2x16xf32>
    %30 = vector.extract_strided_slice %28 {offsets = [2, 0], sizes = [2, 16], strides = [1, 1]} : vector<16x16xf32> to vector<2x16xf32>
    %31 = vector.extract_strided_slice %28 {offsets = [4, 0], sizes = [2, 16], strides = [1, 1]} : vector<16x16xf32> to vector<2x16xf32>
    %32 = vector.extract_strided_slice %28 {offsets = [6, 0], sizes = [2, 16], strides = [1, 1]} : vector<16x16xf32> to vector<2x16xf32>
    %33 = vector.extract_strided_slice %28 {offsets = [8, 0], sizes = [2, 16], strides = [1, 1]} : vector<16x16xf32> to vector<2x16xf32>
    %34 = vector.extract_strided_slice %28 {offsets = [10, 0], sizes = [2, 16], strides = [1, 1]} : vector<16x16xf32> to vector<2x16xf32>
    %35 = vector.extract_strided_slice %28 {offsets = [12, 0], sizes = [2, 16], strides = [1, 1]} : vector<16x16xf32> to vector<2x16xf32>
    %36 = vector.extract_strided_slice %28 {offsets = [14, 0], sizes = [2, 16], strides = [1, 1]} : vector<16x16xf32> to vector<2x16xf32>
    %37 = tpu.concatenate %29, %30, %31, %32, %33, %34, %35, %36 in 1 : vector<2x16xf32>, vector<2x16xf32>, vector<2x16xf32>, vector<2x16xf32>, vector<2x16xf32>, vector<2x16xf32>, vector<2x16xf32>, vector<2x16xf32> -> vector<2x128xf32>
    %38 = vector.extract_strided_slice %27 {offsets = [0, 16], sizes = [16, 16], strides = [1, 1]} : vector<16x32xf32> to vector<16x16xf32>
    %39 = vector.extract_strided_slice %38 {offsets = [0, 0], sizes = [2, 16], strides = [1, 1]} : vector<16x16xf32> to vector<2x16xf32>
    %40 = vector.extract_strided_slice %38 {offsets = [2, 0], sizes = [2, 16], strides = [1, 1]} : vector<16x16xf32> to vector<2x16xf32>
    %41 = vector.extract_strided_slice %38 {offsets = [4, 0], sizes = [2, 16], strides = [1, 1]} : vector<16x16xf32> to vector<2x16xf32>
    %42 = vector.extract_strided_slice %38 {offsets = [6, 0], sizes = [2, 16], strides = [1, 1]} : vector<16x16xf32> to vector<2x16xf32>
    %43 = vector.extract_strided_slice %38 {offsets = [8, 0], sizes = [2, 16], strides = [1, 1]} : vector<16x16xf32> to vector<2x16xf32>
    %44 = vector.extract_strided_slice %38 {offsets = [10, 0], sizes = [2, 16], strides = [1, 1]} : vector<16x16xf32> to vector<2x16xf32>
    %45 = vector.extract_strided_slice %38 {offsets = [12, 0], sizes = [2, 16], strides = [1, 1]} : vector<16x16xf32> to vector<2x16xf32>
    %46 = vector.extract_strided_slice %38 {offsets = [14, 0], sizes = [2, 16], strides = [1, 1]} : vector<16x16xf32> to vector<2x16xf32>
    %47 = tpu.concatenate %39, %40, %41, %42, %43, %44, %45, %46 in 1 : vector<2x16xf32>, vector<2x16xf32>, vector<2x16xf32>, vector<2x16xf32>, vector<2x16xf32>, vector<2x16xf32>, vector<2x16xf32>, vector<2x16xf32> -> vector<2x128xf32>
    %48 = tpu.concatenate %16, %37, %47 in 0 : vector<2x128xf32>, vector<2x128xf32>, vector<2x128xf32> -> vector<6x128xf32>
    %c24 = arith.constant 24 : index
    %c0_18 = arith.constant 0 : index
    %49 = vector.load %arg1[%c24, %c0_18] : memref<120x32xf32, #tpu.memory_space<vmem>>, vector<4x6xf32>
    %c32 = arith.constant 32 : index
    %c0_19 = arith.constant 0 : index
    %50 = vector.load %arg1[%c32, %c0_19] : memref<120x32xf32, #tpu.memory_space<vmem>>, vector<4x1xf32>
    %51 = vector.extract_strided_slice %49 {offsets = [0, 0], sizes = [4, 1], strides = [1, 1]} : vector<4x6xf32> to vector<4x1xf32>
    %52 = vector.extract_strided_slice %48 {offsets = [0, 0], sizes = [1, 128], strides = [1, 1]} : vector<6x128xf32> to vector<1x128xf32>
    %53 = vector.broadcast %51 : vector<4x1xf32> to vector<4x128xf32>
    %54 = vector.broadcast %52 : vector<1x128xf32> to vector<4x128xf32>
    %55 = arith.mulf %53, %54 : vector<4x128xf32>
    %56 = vector.extract_strided_slice %49 {offsets = [0, 1], sizes = [4, 1], strides = [1, 1]} : vector<4x6xf32> to vector<4x1xf32>
    %57 = vector.extract_strided_slice %48 {offsets = [1, 0], sizes = [1, 128], strides = [1, 1]} : vector<6x128xf32> to vector<1x128xf32>
    %58 = vector.broadcast %56 : vector<4x1xf32> to vector<4x128xf32>
    %59 = vector.broadcast %57 : vector<1x128xf32> to vector<4x128xf32>
    %60 = arith.mulf %58, %59 : vector<4x128xf32>
    %61 = arith.addf %55, %60 : vector<4x128xf32>
    %62 = vector.extract_strided_slice %49 {offsets = [0, 2], sizes = [4, 1], strides = [1, 1]} : vector<4x6xf32> to vector<4x1xf32>
    %63 = vector.extract_strided_slice %48 {offsets = [2, 0], sizes = [1, 128], strides = [1, 1]} : vector<6x128xf32> to vector<1x128xf32>
    %64 = vector.broadcast %62 : vector<4x1xf32> to vector<4x128xf32>
    %65 = vector.broadcast %63 : vector<1x128xf32> to vector<4x128xf32>
    %66 = arith.mulf %64, %65 : vector<4x128xf32>
    %67 = arith.addf %61, %66 : vector<4x128xf32>
    %68 = vector.extract_strided_slice %49 {offsets = [0, 3], sizes = [4, 1], strides = [1, 1]} : vector<4x6xf32> to vector<4x1xf32>
    %69 = vector.extract_strided_slice %48 {offsets = [3, 0], sizes = [1, 128], strides = [1, 1]} : vector<6x128xf32> to vector<1x128xf32>
    %70 = vector.broadcast %68 : vector<4x1xf32> to vector<4x128xf32>
    %71 = vector.broadcast %69 : vector<1x128xf32> to vector<4x128xf32>
    %72 = arith.mulf %70, %71 : vector<4x128xf32>
    %73 = arith.addf %67, %72 : vector<4x128xf32>
    %74 = vector.extract_strided_slice %49 {offsets = [0, 4], sizes = [4, 1], strides = [1, 1]} : vector<4x6xf32> to vector<4x1xf32>
    %75 = vector.extract_strided_slice %48 {offsets = [4, 0], sizes = [1, 128], strides = [1, 1]} : vector<6x128xf32> to vector<1x128xf32>
    %76 = vector.broadcast %74 : vector<4x1xf32> to vector<4x128xf32>
    %77 = vector.broadcast %75 : vector<1x128xf32> to vector<4x128xf32>
    %78 = arith.mulf %76, %77 : vector<4x128xf32>
    %79 = arith.addf %73, %78 : vector<4x128xf32>
    %80 = vector.extract_strided_slice %49 {offsets = [0, 5], sizes = [4, 1], strides = [1, 1]} : vector<4x6xf32> to vector<4x1xf32>
    %81 = vector.extract_strided_slice %48 {offsets = [5, 0], sizes = [1, 128], strides = [1, 1]} : vector<6x128xf32> to vector<1x128xf32>
    %82 = vector.broadcast %80 : vector<4x1xf32> to vector<4x128xf32>
    %83 = vector.broadcast %81 : vector<1x128xf32> to vector<4x128xf32>
    %84 = arith.mulf %82, %83 : vector<4x128xf32>
    %85 = arith.addf %79, %84 : vector<4x128xf32>
    %86 = vector.broadcast %50 : vector<4x1xf32> to vector<4x128xf32>
    %87 = arith.addf %85, %86 : vector<4x128xf32>
    %88 = math.tanh %87 : vector<4x128xf32>
    %c0_20 = arith.constant 0 : index
    %c0_21 = arith.constant 0 : index
    %89 = vector.load %arg1[%c0_20, %c0_21] : memref<120x32xf32, #tpu.memory_space<vmem>>, vector<16x32xf32>
    %90 = vector.extract_strided_slice %88 {offsets = [0, 0], sizes = [4, 16], strides = [1, 1]} : vector<4x128xf32> to vector<4x16xf32>
    %91 = vector.extract_strided_slice %88 {offsets = [0, 16], sizes = [4, 16], strides = [1, 1]} : vector<4x128xf32> to vector<4x16xf32>
    %92 = vector.extract_strided_slice %88 {offsets = [0, 32], sizes = [4, 16], strides = [1, 1]} : vector<4x128xf32> to vector<4x16xf32>
    %93 = vector.extract_strided_slice %88 {offsets = [0, 48], sizes = [4, 16], strides = [1, 1]} : vector<4x128xf32> to vector<4x16xf32>
    %94 = vector.extract_strided_slice %88 {offsets = [0, 64], sizes = [4, 16], strides = [1, 1]} : vector<4x128xf32> to vector<4x16xf32>
    %95 = vector.extract_strided_slice %88 {offsets = [0, 80], sizes = [4, 16], strides = [1, 1]} : vector<4x128xf32> to vector<4x16xf32>
    %96 = vector.extract_strided_slice %88 {offsets = [0, 96], sizes = [4, 16], strides = [1, 1]} : vector<4x128xf32> to vector<4x16xf32>
    %97 = vector.extract_strided_slice %88 {offsets = [0, 112], sizes = [4, 16], strides = [1, 1]} : vector<4x128xf32> to vector<4x16xf32>
    %98 = tpu.concatenate %90, %91, %92, %93, %94, %95, %96, %97 in 0 : vector<4x16xf32>, vector<4x16xf32>, vector<4x16xf32>, vector<4x16xf32>, vector<4x16xf32>, vector<4x16xf32>, vector<4x16xf32>, vector<4x16xf32> -> vector<32x16xf32>
    %cst_22 = arith.constant dense<0.000000e+00> : vector<32x32xf32>
    %99 = tpu.matmul %98, %89, %cst_22 {dimension_numbers = #tpu.dot_dimension_numbers<[1], [0], [0], [1], [0, 0, 1, 1], [], []>} : vector<32x16xf32>, vector<16x32xf32>, vector<32x32xf32> -> vector<32x32xf32>
    %100 = vector.extract_strided_slice %99 {offsets = [0, 0], sizes = [32, 16], strides = [1, 1]} : vector<32x32xf32> to vector<32x16xf32>
    %101 = vector.extract_strided_slice %100 {offsets = [0, 0], sizes = [4, 16], strides = [1, 1]} : vector<32x16xf32> to vector<4x16xf32>
    %102 = vector.extract_strided_slice %100 {offsets = [4, 0], sizes = [4, 16], strides = [1, 1]} : vector<32x16xf32> to vector<4x16xf32>
    %103 = vector.extract_strided_slice %100 {offsets = [8, 0], sizes = [4, 16], strides = [1, 1]} : vector<32x16xf32> to vector<4x16xf32>
    %104 = vector.extract_strided_slice %100 {offsets = [12, 0], sizes = [4, 16], strides = [1, 1]} : vector<32x16xf32> to vector<4x16xf32>
    %105 = vector.extract_strided_slice %100 {offsets = [16, 0], sizes = [4, 16], strides = [1, 1]} : vector<32x16xf32> to vector<4x16xf32>
    %106 = vector.extract_strided_slice %100 {offsets = [20, 0], sizes = [4, 16], strides = [1, 1]} : vector<32x16xf32> to vector<4x16xf32>
    %107 = vector.extract_strided_slice %100 {offsets = [24, 0], sizes = [4, 16], strides = [1, 1]} : vector<32x16xf32> to vector<4x16xf32>
    %108 = vector.extract_strided_slice %100 {offsets = [28, 0], sizes = [4, 16], strides = [1, 1]} : vector<32x16xf32> to vector<4x16xf32>
    %109 = tpu.concatenate %101, %102, %103, %104, %105, %106, %107, %108 in 1 : vector<4x16xf32>, vector<4x16xf32>, vector<4x16xf32>, vector<4x16xf32>, vector<4x16xf32>, vector<4x16xf32>, vector<4x16xf32>, vector<4x16xf32> -> vector<4x128xf32>
    %110 = vector.extract_strided_slice %99 {offsets = [0, 16], sizes = [32, 16], strides = [1, 1]} : vector<32x32xf32> to vector<32x16xf32>
    %111 = vector.extract_strided_slice %110 {offsets = [0, 0], sizes = [4, 16], strides = [1, 1]} : vector<32x16xf32> to vector<4x16xf32>
    %112 = vector.extract_strided_slice %110 {offsets = [4, 0], sizes = [4, 16], strides = [1, 1]} : vector<32x16xf32> to vector<4x16xf32>
    %113 = vector.extract_strided_slice %110 {offsets = [8, 0], sizes = [4, 16], strides = [1, 1]} : vector<32x16xf32> to vector<4x16xf32>
    %114 = vector.extract_strided_slice %110 {offsets = [12, 0], sizes = [4, 16], strides = [1, 1]} : vector<32x16xf32> to vector<4x16xf32>
    %115 = vector.extract_strided_slice %110 {offsets = [16, 0], sizes = [4, 16], strides = [1, 1]} : vector<32x16xf32> to vector<4x16xf32>
    %116 = vector.extract_strided_slice %110 {offsets = [20, 0], sizes = [4, 16], strides = [1, 1]} : vector<32x16xf32> to vector<4x16xf32>
    %117 = vector.extract_strided_slice %110 {offsets = [24, 0], sizes = [4, 16], strides = [1, 1]} : vector<32x16xf32> to vector<4x16xf32>
    %118 = vector.extract_strided_slice %110 {offsets = [28, 0], sizes = [4, 16], strides = [1, 1]} : vector<32x16xf32> to vector<4x16xf32>
    %119 = tpu.concatenate %111, %112, %113, %114, %115, %116, %117, %118 in 1 : vector<4x16xf32>, vector<4x16xf32>, vector<4x16xf32>, vector<4x16xf32>, vector<4x16xf32>, vector<4x16xf32>, vector<4x16xf32>, vector<4x16xf32> -> vector<4x128xf32>
    %120 = tpu.concatenate %88, %109, %119 in 0 : vector<4x128xf32>, vector<4x128xf32>, vector<4x128xf32> -> vector<12x128xf32>
    %c40 = arith.constant 40 : index
    %c0_23 = arith.constant 0 : index
    %121 = vector.load %arg1[%c40, %c0_23] : memref<120x32xf32, #tpu.memory_space<vmem>>, vector<8x12xf32>
    %c48 = arith.constant 48 : index
    %c0_24 = arith.constant 0 : index
    %122 = vector.load %arg1[%c48, %c0_24] : memref<120x32xf32, #tpu.memory_space<vmem>>, vector<8x1xf32>
    %cst_25 = arith.constant dense<0.000000e+00> : vector<8x128xf32>
    %123 = tpu.matmul %121, %120, %cst_25 {dimension_numbers = #tpu.dot_dimension_numbers<[1], [0], [0], [1], [0, 0, 1, 1], [], []>} : vector<8x12xf32>, vector<12x128xf32>, vector<8x128xf32> -> vector<8x128xf32>
    %124 = vector.broadcast %122 : vector<8x1xf32> to vector<8x128xf32>
    %125 = arith.addf %123, %124 : vector<8x128xf32>
    %126 = math.tanh %125 : vector<8x128xf32>
    %127 = tpu.transpose %126, [1, 0] : vector<8x128xf32> -> vector<128x8xf32>
    %128 = vector.extract_strided_slice %127 {offsets = [0, 0], sizes = [16, 8], strides = [1, 1]} : vector<128x8xf32> to vector<16x8xf32>
    %129 = vector.extract_strided_slice %127 {offsets = [16, 0], sizes = [16, 8], strides = [1, 1]} : vector<128x8xf32> to vector<16x8xf32>
    %130 = vector.extract_strided_slice %127 {offsets = [32, 0], sizes = [16, 8], strides = [1, 1]} : vector<128x8xf32> to vector<16x8xf32>
    %131 = vector.extract_strided_slice %127 {offsets = [48, 0], sizes = [16, 8], strides = [1, 1]} : vector<128x8xf32> to vector<16x8xf32>
    %132 = vector.extract_strided_slice %127 {offsets = [64, 0], sizes = [16, 8], strides = [1, 1]} : vector<128x8xf32> to vector<16x8xf32>
    %133 = vector.extract_strided_slice %127 {offsets = [80, 0], sizes = [16, 8], strides = [1, 1]} : vector<128x8xf32> to vector<16x8xf32>
    %134 = vector.extract_strided_slice %127 {offsets = [96, 0], sizes = [16, 8], strides = [1, 1]} : vector<128x8xf32> to vector<16x8xf32>
    %135 = vector.extract_strided_slice %127 {offsets = [112, 0], sizes = [16, 8], strides = [1, 1]} : vector<128x8xf32> to vector<16x8xf32>
    %136 = tpu.concatenate %128, %129, %130, %131, %132, %133, %134, %135 in 1 : vector<16x8xf32>, vector<16x8xf32>, vector<16x8xf32>, vector<16x8xf32>, vector<16x8xf32>, vector<16x8xf32>, vector<16x8xf32>, vector<16x8xf32> -> vector<16x64xf32>
    %c16 = arith.constant 16 : index
    %c0_26 = arith.constant 0 : index
    %137 = vector.load %arg1[%c16, %c0_26] : memref<120x32xf32, #tpu.memory_space<vmem>>, vector<8x8xf32>
    %138 = vector.extract_strided_slice %136 {offsets = [0, 0], sizes = [16, 8], strides = [1, 1]} : vector<16x64xf32> to vector<16x8xf32>
    %139 = vector.extract_strided_slice %136 {offsets = [0, 8], sizes = [16, 8], strides = [1, 1]} : vector<16x64xf32> to vector<16x8xf32>
    %140 = vector.extract_strided_slice %136 {offsets = [0, 16], sizes = [16, 8], strides = [1, 1]} : vector<16x64xf32> to vector<16x8xf32>
    %141 = vector.extract_strided_slice %136 {offsets = [0, 24], sizes = [16, 8], strides = [1, 1]} : vector<16x64xf32> to vector<16x8xf32>
    %142 = vector.extract_strided_slice %136 {offsets = [0, 32], sizes = [16, 8], strides = [1, 1]} : vector<16x64xf32> to vector<16x8xf32>
    %143 = vector.extract_strided_slice %136 {offsets = [0, 40], sizes = [16, 8], strides = [1, 1]} : vector<16x64xf32> to vector<16x8xf32>
    %144 = vector.extract_strided_slice %136 {offsets = [0, 48], sizes = [16, 8], strides = [1, 1]} : vector<16x64xf32> to vector<16x8xf32>
    %145 = vector.extract_strided_slice %136 {offsets = [0, 56], sizes = [16, 8], strides = [1, 1]} : vector<16x64xf32> to vector<16x8xf32>
    %146 = tpu.concatenate %138, %139, %140, %141, %142, %143, %144, %145 in 0 : vector<16x8xf32>, vector<16x8xf32>, vector<16x8xf32>, vector<16x8xf32>, vector<16x8xf32>, vector<16x8xf32>, vector<16x8xf32>, vector<16x8xf32> -> vector<128x8xf32>
    %cst_27 = arith.constant dense<0.000000e+00> : vector<128x8xf32>
    %147 = tpu.matmul %146, %137, %cst_27 {dimension_numbers = #tpu.dot_dimension_numbers<[1], [0], [0], [1], [0, 0, 1, 1], [], []>} : vector<128x8xf32>, vector<8x8xf32>, vector<128x8xf32> -> vector<128x8xf32>
    %148 = vector.extract_strided_slice %147 {offsets = [0, 0], sizes = [16, 8], strides = [1, 1]} : vector<128x8xf32> to vector<16x8xf32>
    %149 = vector.extract_strided_slice %147 {offsets = [16, 0], sizes = [16, 8], strides = [1, 1]} : vector<128x8xf32> to vector<16x8xf32>
    %150 = vector.extract_strided_slice %147 {offsets = [32, 0], sizes = [16, 8], strides = [1, 1]} : vector<128x8xf32> to vector<16x8xf32>
    %151 = vector.extract_strided_slice %147 {offsets = [48, 0], sizes = [16, 8], strides = [1, 1]} : vector<128x8xf32> to vector<16x8xf32>
    %152 = vector.extract_strided_slice %147 {offsets = [64, 0], sizes = [16, 8], strides = [1, 1]} : vector<128x8xf32> to vector<16x8xf32>
    %153 = vector.extract_strided_slice %147 {offsets = [80, 0], sizes = [16, 8], strides = [1, 1]} : vector<128x8xf32> to vector<16x8xf32>
    %154 = vector.extract_strided_slice %147 {offsets = [96, 0], sizes = [16, 8], strides = [1, 1]} : vector<128x8xf32> to vector<16x8xf32>
    %155 = vector.extract_strided_slice %147 {offsets = [112, 0], sizes = [16, 8], strides = [1, 1]} : vector<128x8xf32> to vector<16x8xf32>
    %156 = tpu.concatenate %148, %149, %150, %151, %152, %153, %154, %155 in 1 : vector<16x8xf32>, vector<16x8xf32>, vector<16x8xf32>, vector<16x8xf32>, vector<16x8xf32>, vector<16x8xf32>, vector<16x8xf32>, vector<16x8xf32> -> vector<16x64xf32>
    %157 = tpu.concatenate %136, %156 in 0 : vector<16x64xf32>, vector<16x64xf32> -> vector<32x64xf32>
    %c56 = arith.constant 56 : index
    %c0_28 = arith.constant 0 : index
    %158 = vector.load %arg1[%c56, %c0_28] : memref<120x32xf32, #tpu.memory_space<vmem>>, vector<4x32xf32>
    %c64 = arith.constant 64 : index
    %c0_29 = arith.constant 0 : index
    %159 = vector.load %arg1[%c64, %c0_29] : memref<120x32xf32, #tpu.memory_space<vmem>>, vector<4x1xf32>
    %cst_30 = arith.constant dense<0.000000e+00> : vector<4x64xf32>
    %160 = tpu.matmul %158, %157, %cst_30 {dimension_numbers = #tpu.dot_dimension_numbers<[1], [0], [0], [1], [0, 0, 1, 1], [], []>} : vector<4x32xf32>, vector<32x64xf32>, vector<4x64xf32> -> vector<4x64xf32>
    %161 = vector.broadcast %159 : vector<4x1xf32> to vector<4x64xf32>
    %162 = arith.addf %160, %161 : vector<4x64xf32>
    %163 = math.tanh %162 : vector<4x64xf32>
    %c16_31 = arith.constant 16 : index
    %c0_32 = arith.constant 0 : index
    %164 = vector.load %arg1[%c16_31, %c0_32] : memref<120x32xf32, #tpu.memory_space<vmem>>, vector<8x8xf32>
    %165 = vector.extract_strided_slice %163 {offsets = [0, 0], sizes = [4, 8], strides = [1, 1]} : vector<4x64xf32> to vector<4x8xf32>
    %166 = vector.extract_strided_slice %163 {offsets = [0, 8], sizes = [4, 8], strides = [1, 1]} : vector<4x64xf32> to vector<4x8xf32>
    %167 = vector.extract_strided_slice %163 {offsets = [0, 16], sizes = [4, 8], strides = [1, 1]} : vector<4x64xf32> to vector<4x8xf32>
    %168 = vector.extract_strided_slice %163 {offsets = [0, 24], sizes = [4, 8], strides = [1, 1]} : vector<4x64xf32> to vector<4x8xf32>
    %169 = vector.extract_strided_slice %163 {offsets = [0, 32], sizes = [4, 8], strides = [1, 1]} : vector<4x64xf32> to vector<4x8xf32>
    %170 = vector.extract_strided_slice %163 {offsets = [0, 40], sizes = [4, 8], strides = [1, 1]} : vector<4x64xf32> to vector<4x8xf32>
    %171 = vector.extract_strided_slice %163 {offsets = [0, 48], sizes = [4, 8], strides = [1, 1]} : vector<4x64xf32> to vector<4x8xf32>
    %172 = vector.extract_strided_slice %163 {offsets = [0, 56], sizes = [4, 8], strides = [1, 1]} : vector<4x64xf32> to vector<4x8xf32>
    %173 = tpu.concatenate %165, %166, %167, %168, %169, %170, %171, %172 in 0 : vector<4x8xf32>, vector<4x8xf32>, vector<4x8xf32>, vector<4x8xf32>, vector<4x8xf32>, vector<4x8xf32>, vector<4x8xf32>, vector<4x8xf32> -> vector<32x8xf32>
    %cst_33 = arith.constant dense<0.000000e+00> : vector<32x8xf32>
    %174 = tpu.matmul %173, %164, %cst_33 {dimension_numbers = #tpu.dot_dimension_numbers<[1], [0], [0], [1], [0, 0, 1, 1], [], []>} : vector<32x8xf32>, vector<8x8xf32>, vector<32x8xf32> -> vector<32x8xf32>
    %175 = vector.extract_strided_slice %174 {offsets = [0, 0], sizes = [4, 8], strides = [1, 1]} : vector<32x8xf32> to vector<4x8xf32>
    %176 = vector.extract_strided_slice %174 {offsets = [4, 0], sizes = [4, 8], strides = [1, 1]} : vector<32x8xf32> to vector<4x8xf32>
    %177 = vector.extract_strided_slice %174 {offsets = [8, 0], sizes = [4, 8], strides = [1, 1]} : vector<32x8xf32> to vector<4x8xf32>
    %178 = vector.extract_strided_slice %174 {offsets = [12, 0], sizes = [4, 8], strides = [1, 1]} : vector<32x8xf32> to vector<4x8xf32>
    %179 = vector.extract_strided_slice %174 {offsets = [16, 0], sizes = [4, 8], strides = [1, 1]} : vector<32x8xf32> to vector<4x8xf32>
    %180 = vector.extract_strided_slice %174 {offsets = [20, 0], sizes = [4, 8], strides = [1, 1]} : vector<32x8xf32> to vector<4x8xf32>
    %181 = vector.extract_strided_slice %174 {offsets = [24, 0], sizes = [4, 8], strides = [1, 1]} : vector<32x8xf32> to vector<4x8xf32>
    %182 = vector.extract_strided_slice %174 {offsets = [28, 0], sizes = [4, 8], strides = [1, 1]} : vector<32x8xf32> to vector<4x8xf32>
    %183 = tpu.concatenate %175, %176, %177, %178, %179, %180, %181, %182 in 1 : vector<4x8xf32>, vector<4x8xf32>, vector<4x8xf32>, vector<4x8xf32>, vector<4x8xf32>, vector<4x8xf32>, vector<4x8xf32>, vector<4x8xf32> -> vector<4x64xf32>
    %184 = tpu.concatenate %163, %183 in 0 : vector<4x64xf32>, vector<4x64xf32> -> vector<8x64xf32>
    %c72 = arith.constant 72 : index
    %c0_34 = arith.constant 0 : index
    %185 = vector.load %arg1[%c72, %c0_34] : memref<120x32xf32, #tpu.memory_space<vmem>>, vector<4x8xf32>
    %c80 = arith.constant 80 : index
    %c0_35 = arith.constant 0 : index
    %186 = vector.load %arg1[%c80, %c0_35] : memref<120x32xf32, #tpu.memory_space<vmem>>, vector<4x1xf32>
    %187 = vector.extract_strided_slice %185 {offsets = [0, 0], sizes = [4, 1], strides = [1, 1]} : vector<4x8xf32> to vector<4x1xf32>
    %188 = vector.extract_strided_slice %184 {offsets = [0, 0], sizes = [1, 64], strides = [1, 1]} : vector<8x64xf32> to vector<1x64xf32>
    %189 = vector.broadcast %187 : vector<4x1xf32> to vector<4x64xf32>
    %190 = vector.broadcast %188 : vector<1x64xf32> to vector<4x64xf32>
    %191 = arith.mulf %189, %190 : vector<4x64xf32>
    %192 = vector.extract_strided_slice %185 {offsets = [0, 1], sizes = [4, 1], strides = [1, 1]} : vector<4x8xf32> to vector<4x1xf32>
    %193 = vector.extract_strided_slice %184 {offsets = [1, 0], sizes = [1, 64], strides = [1, 1]} : vector<8x64xf32> to vector<1x64xf32>
    %194 = vector.broadcast %192 : vector<4x1xf32> to vector<4x64xf32>
    %195 = vector.broadcast %193 : vector<1x64xf32> to vector<4x64xf32>
    %196 = arith.mulf %194, %195 : vector<4x64xf32>
    %197 = arith.addf %191, %196 : vector<4x64xf32>
    %198 = vector.extract_strided_slice %185 {offsets = [0, 2], sizes = [4, 1], strides = [1, 1]} : vector<4x8xf32> to vector<4x1xf32>
    %199 = vector.extract_strided_slice %184 {offsets = [2, 0], sizes = [1, 64], strides = [1, 1]} : vector<8x64xf32> to vector<1x64xf32>
    %200 = vector.broadcast %198 : vector<4x1xf32> to vector<4x64xf32>
    %201 = vector.broadcast %199 : vector<1x64xf32> to vector<4x64xf32>
    %202 = arith.mulf %200, %201 : vector<4x64xf32>
    %203 = arith.addf %197, %202 : vector<4x64xf32>
    %204 = vector.extract_strided_slice %185 {offsets = [0, 3], sizes = [4, 1], strides = [1, 1]} : vector<4x8xf32> to vector<4x1xf32>
    %205 = vector.extract_strided_slice %184 {offsets = [3, 0], sizes = [1, 64], strides = [1, 1]} : vector<8x64xf32> to vector<1x64xf32>
    %206 = vector.broadcast %204 : vector<4x1xf32> to vector<4x64xf32>
    %207 = vector.broadcast %205 : vector<1x64xf32> to vector<4x64xf32>
    %208 = arith.mulf %206, %207 : vector<4x64xf32>
    %209 = arith.addf %203, %208 : vector<4x64xf32>
    %210 = vector.extract_strided_slice %185 {offsets = [0, 4], sizes = [4, 1], strides = [1, 1]} : vector<4x8xf32> to vector<4x1xf32>
    %211 = vector.extract_strided_slice %184 {offsets = [4, 0], sizes = [1, 64], strides = [1, 1]} : vector<8x64xf32> to vector<1x64xf32>
    %212 = vector.broadcast %210 : vector<4x1xf32> to vector<4x64xf32>
    %213 = vector.broadcast %211 : vector<1x64xf32> to vector<4x64xf32>
    %214 = arith.mulf %212, %213 : vector<4x64xf32>
    %215 = arith.addf %209, %214 : vector<4x64xf32>
    %216 = vector.extract_strided_slice %185 {offsets = [0, 5], sizes = [4, 1], strides = [1, 1]} : vector<4x8xf32> to vector<4x1xf32>
    %217 = vector.extract_strided_slice %184 {offsets = [5, 0], sizes = [1, 64], strides = [1, 1]} : vector<8x64xf32> to vector<1x64xf32>
    %218 = vector.broadcast %216 : vector<4x1xf32> to vector<4x64xf32>
    %219 = vector.broadcast %217 : vector<1x64xf32> to vector<4x64xf32>
    %220 = arith.mulf %218, %219 : vector<4x64xf32>
    %221 = arith.addf %215, %220 : vector<4x64xf32>
    %222 = vector.extract_strided_slice %185 {offsets = [0, 6], sizes = [4, 1], strides = [1, 1]} : vector<4x8xf32> to vector<4x1xf32>
    %223 = vector.extract_strided_slice %184 {offsets = [6, 0], sizes = [1, 64], strides = [1, 1]} : vector<8x64xf32> to vector<1x64xf32>
    %224 = vector.broadcast %222 : vector<4x1xf32> to vector<4x64xf32>
    %225 = vector.broadcast %223 : vector<1x64xf32> to vector<4x64xf32>
    %226 = arith.mulf %224, %225 : vector<4x64xf32>
    %227 = arith.addf %221, %226 : vector<4x64xf32>
    %228 = vector.extract_strided_slice %185 {offsets = [0, 7], sizes = [4, 1], strides = [1, 1]} : vector<4x8xf32> to vector<4x1xf32>
    %229 = vector.extract_strided_slice %184 {offsets = [7, 0], sizes = [1, 64], strides = [1, 1]} : vector<8x64xf32> to vector<1x64xf32>
    %230 = vector.broadcast %228 : vector<4x1xf32> to vector<4x64xf32>
    %231 = vector.broadcast %229 : vector<1x64xf32> to vector<4x64xf32>
    %232 = arith.mulf %230, %231 : vector<4x64xf32>
    %233 = arith.addf %227, %232 : vector<4x64xf32>
    %234 = vector.broadcast %186 : vector<4x1xf32> to vector<4x64xf32>
    %235 = arith.addf %233, %234 : vector<4x64xf32>
    %236 = math.tanh %235 : vector<4x64xf32>
    %c88 = arith.constant 88 : index
    %c0_36 = arith.constant 0 : index
    %237 = vector.load %arg1[%c88, %c0_36] : memref<120x32xf32, #tpu.memory_space<vmem>>, vector<8x4xf32>
    %c96 = arith.constant 96 : index
    %c0_37 = arith.constant 0 : index
    %238 = vector.load %arg1[%c96, %c0_37] : memref<120x32xf32, #tpu.memory_space<vmem>>, vector<8x1xf32>
    %239 = vector.extract_strided_slice %237 {offsets = [0, 0], sizes = [8, 1], strides = [1, 1]} : vector<8x4xf32> to vector<8x1xf32>
    %240 = vector.extract_strided_slice %236 {offsets = [0, 0], sizes = [1, 64], strides = [1, 1]} : vector<4x64xf32> to vector<1x64xf32>
    %241 = vector.broadcast %239 : vector<8x1xf32> to vector<8x64xf32>
    %242 = vector.broadcast %240 : vector<1x64xf32> to vector<8x64xf32>
    %243 = arith.mulf %241, %242 : vector<8x64xf32>
    %244 = vector.extract_strided_slice %237 {offsets = [0, 1], sizes = [8, 1], strides = [1, 1]} : vector<8x4xf32> to vector<8x1xf32>
    %245 = vector.extract_strided_slice %236 {offsets = [1, 0], sizes = [1, 64], strides = [1, 1]} : vector<4x64xf32> to vector<1x64xf32>
    %246 = vector.broadcast %244 : vector<8x1xf32> to vector<8x64xf32>
    %247 = vector.broadcast %245 : vector<1x64xf32> to vector<8x64xf32>
    %248 = arith.mulf %246, %247 : vector<8x64xf32>
    %249 = arith.addf %243, %248 : vector<8x64xf32>
    %250 = vector.extract_strided_slice %237 {offsets = [0, 2], sizes = [8, 1], strides = [1, 1]} : vector<8x4xf32> to vector<8x1xf32>
    %251 = vector.extract_strided_slice %236 {offsets = [2, 0], sizes = [1, 64], strides = [1, 1]} : vector<4x64xf32> to vector<1x64xf32>
    %252 = vector.broadcast %250 : vector<8x1xf32> to vector<8x64xf32>
    %253 = vector.broadcast %251 : vector<1x64xf32> to vector<8x64xf32>
    %254 = arith.mulf %252, %253 : vector<8x64xf32>
    %255 = arith.addf %249, %254 : vector<8x64xf32>
    %256 = vector.extract_strided_slice %237 {offsets = [0, 3], sizes = [8, 1], strides = [1, 1]} : vector<8x4xf32> to vector<8x1xf32>
    %257 = vector.extract_strided_slice %236 {offsets = [3, 0], sizes = [1, 64], strides = [1, 1]} : vector<4x64xf32> to vector<1x64xf32>
    %258 = vector.broadcast %256 : vector<8x1xf32> to vector<8x64xf32>
    %259 = vector.broadcast %257 : vector<1x64xf32> to vector<8x64xf32>
    %260 = arith.mulf %258, %259 : vector<8x64xf32>
    %261 = arith.addf %255, %260 : vector<8x64xf32>
    %262 = vector.broadcast %238 : vector<8x1xf32> to vector<8x64xf32>
    %263 = arith.addf %261, %262 : vector<8x64xf32>
    %264 = math.tanh %263 : vector<8x64xf32>
    %c104 = arith.constant 104 : index
    %c0_38 = arith.constant 0 : index
    %265 = vector.load %arg1[%c104, %c0_38] : memref<120x32xf32, #tpu.memory_space<vmem>>, vector<2x8xf32>
    %c112 = arith.constant 112 : index
    %c0_39 = arith.constant 0 : index
    %266 = vector.load %arg1[%c112, %c0_39] : memref<120x32xf32, #tpu.memory_space<vmem>>, vector<2x1xf32>
    %267 = vector.extract_strided_slice %265 {offsets = [0, 0], sizes = [2, 1], strides = [1, 1]} : vector<2x8xf32> to vector<2x1xf32>
    %268 = vector.extract_strided_slice %264 {offsets = [0, 0], sizes = [1, 64], strides = [1, 1]} : vector<8x64xf32> to vector<1x64xf32>
    %269 = vector.broadcast %267 : vector<2x1xf32> to vector<2x64xf32>
    %270 = vector.broadcast %268 : vector<1x64xf32> to vector<2x64xf32>
    %271 = arith.mulf %269, %270 : vector<2x64xf32>
    %272 = vector.extract_strided_slice %265 {offsets = [0, 1], sizes = [2, 1], strides = [1, 1]} : vector<2x8xf32> to vector<2x1xf32>
    %273 = vector.extract_strided_slice %264 {offsets = [1, 0], sizes = [1, 64], strides = [1, 1]} : vector<8x64xf32> to vector<1x64xf32>
    %274 = vector.broadcast %272 : vector<2x1xf32> to vector<2x64xf32>
    %275 = vector.broadcast %273 : vector<1x64xf32> to vector<2x64xf32>
    %276 = arith.mulf %274, %275 : vector<2x64xf32>
    %277 = arith.addf %271, %276 : vector<2x64xf32>
    %278 = vector.extract_strided_slice %265 {offsets = [0, 2], sizes = [2, 1], strides = [1, 1]} : vector<2x8xf32> to vector<2x1xf32>
    %279 = vector.extract_strided_slice %264 {offsets = [2, 0], sizes = [1, 64], strides = [1, 1]} : vector<8x64xf32> to vector<1x64xf32>
    %280 = vector.broadcast %278 : vector<2x1xf32> to vector<2x64xf32>
    %281 = vector.broadcast %279 : vector<1x64xf32> to vector<2x64xf32>
    %282 = arith.mulf %280, %281 : vector<2x64xf32>
    %283 = arith.addf %277, %282 : vector<2x64xf32>
    %284 = vector.extract_strided_slice %265 {offsets = [0, 3], sizes = [2, 1], strides = [1, 1]} : vector<2x8xf32> to vector<2x1xf32>
    %285 = vector.extract_strided_slice %264 {offsets = [3, 0], sizes = [1, 64], strides = [1, 1]} : vector<8x64xf32> to vector<1x64xf32>
    %286 = vector.broadcast %284 : vector<2x1xf32> to vector<2x64xf32>
    %287 = vector.broadcast %285 : vector<1x64xf32> to vector<2x64xf32>
    %288 = arith.mulf %286, %287 : vector<2x64xf32>
    %289 = arith.addf %283, %288 : vector<2x64xf32>
    %290 = vector.extract_strided_slice %265 {offsets = [0, 4], sizes = [2, 1], strides = [1, 1]} : vector<2x8xf32> to vector<2x1xf32>
    %291 = vector.extract_strided_slice %264 {offsets = [4, 0], sizes = [1, 64], strides = [1, 1]} : vector<8x64xf32> to vector<1x64xf32>
    %292 = vector.broadcast %290 : vector<2x1xf32> to vector<2x64xf32>
    %293 = vector.broadcast %291 : vector<1x64xf32> to vector<2x64xf32>
    %294 = arith.mulf %292, %293 : vector<2x64xf32>
    %295 = arith.addf %289, %294 : vector<2x64xf32>
    %296 = vector.extract_strided_slice %265 {offsets = [0, 5], sizes = [2, 1], strides = [1, 1]} : vector<2x8xf32> to vector<2x1xf32>
    %297 = vector.extract_strided_slice %264 {offsets = [5, 0], sizes = [1, 64], strides = [1, 1]} : vector<8x64xf32> to vector<1x64xf32>
    %298 = vector.broadcast %296 : vector<2x1xf32> to vector<2x64xf32>
    %299 = vector.broadcast %297 : vector<1x64xf32> to vector<2x64xf32>
    %300 = arith.mulf %298, %299 : vector<2x64xf32>
    %301 = arith.addf %295, %300 : vector<2x64xf32>
    %302 = vector.extract_strided_slice %265 {offsets = [0, 6], sizes = [2, 1], strides = [1, 1]} : vector<2x8xf32> to vector<2x1xf32>
    %303 = vector.extract_strided_slice %264 {offsets = [6, 0], sizes = [1, 64], strides = [1, 1]} : vector<8x64xf32> to vector<1x64xf32>
    %304 = vector.broadcast %302 : vector<2x1xf32> to vector<2x64xf32>
    %305 = vector.broadcast %303 : vector<1x64xf32> to vector<2x64xf32>
    %306 = arith.mulf %304, %305 : vector<2x64xf32>
    %307 = arith.addf %301, %306 : vector<2x64xf32>
    %308 = vector.extract_strided_slice %265 {offsets = [0, 7], sizes = [2, 1], strides = [1, 1]} : vector<2x8xf32> to vector<2x1xf32>
    %309 = vector.extract_strided_slice %264 {offsets = [7, 0], sizes = [1, 64], strides = [1, 1]} : vector<8x64xf32> to vector<1x64xf32>
    %310 = vector.broadcast %308 : vector<2x1xf32> to vector<2x64xf32>
    %311 = vector.broadcast %309 : vector<1x64xf32> to vector<2x64xf32>
    %312 = arith.mulf %310, %311 : vector<2x64xf32>
    %313 = arith.addf %307, %312 : vector<2x64xf32>
    %314 = vector.broadcast %266 : vector<2x1xf32> to vector<2x64xf32>
    %315 = arith.addf %313, %314 : vector<2x64xf32>
    %316 = math.tanh %315 : vector<2x64xf32>
    %317 = vector.extract_strided_slice %316 {offsets = [0, 0], sizes = [2, 8], strides = [1, 1]} : vector<2x64xf32> to vector<2x8xf32>
    %c0_40 = arith.constant 0 : index
    %c0_41 = arith.constant 0 : index
    %c0_42 = arith.constant 0 : index
    %318 = vector.load %arg2[%c0_40, %c0_41, %c0_42] : memref<8x2x8xf32, #tpu.memory_space<vmem>>, vector<1x2x8xf32>
    %319 = vector.shape_cast %318 : vector<1x2x8xf32> to vector<2x8xf32>
    %320 = vector.shape_cast %317 : vector<2x8xf32> to vector<1x2x8xf32>
    tpu.vector_store %arg2[%c0_40, %c0_41, %c0_42], %320 {strides = array<i32>} : memref<8x2x8xf32, #tpu.memory_space<vmem>>, vector<1x2x8xf32>,
    %321 = vector.extract_strided_slice %316 {offsets = [0, 8], sizes = [2, 8], strides = [1, 1]} : vector<2x64xf32> to vector<2x8xf32>
    %c1_43 = arith.constant 1 : index
    %c0_44 = arith.constant 0 : index
    %c0_45 = arith.constant 0 : index
    %322 = vector.load %arg2[%c1_43, %c0_44, %c0_45] : memref<8x2x8xf32, #tpu.memory_space<vmem>>, vector<1x2x8xf32>
    %323 = vector.shape_cast %322 : vector<1x2x8xf32> to vector<2x8xf32>
    %324 = vector.shape_cast %321 : vector<2x8xf32> to vector<1x2x8xf32>
    tpu.vector_store %arg2[%c1_43, %c0_44, %c0_45], %324 {strides = array<i32>} : memref<8x2x8xf32, #tpu.memory_space<vmem>>, vector<1x2x8xf32>,
    %325 = vector.extract_strided_slice %316 {offsets = [0, 16], sizes = [2, 8], strides = [1, 1]} : vector<2x64xf32> to vector<2x8xf32>
    %c2_46 = arith.constant 2 : index
    %c0_47 = arith.constant 0 : index
    %c0_48 = arith.constant 0 : index
    %326 = vector.load %arg2[%c2_46, %c0_47, %c0_48] : memref<8x2x8xf32, #tpu.memory_space<vmem>>, vector<1x2x8xf32>
    %327 = vector.shape_cast %326 : vector<1x2x8xf32> to vector<2x8xf32>
    %328 = vector.shape_cast %325 : vector<2x8xf32> to vector<1x2x8xf32>
    tpu.vector_store %arg2[%c2_46, %c0_47, %c0_48], %328 {strides = array<i32>} : memref<8x2x8xf32, #tpu.memory_space<vmem>>, vector<1x2x8xf32>,
    %329 = vector.extract_strided_slice %316 {offsets = [0, 24], sizes = [2, 8], strides = [1, 1]} : vector<2x64xf32> to vector<2x8xf32>
    %c3_49 = arith.constant 3 : index
    %c0_50 = arith.constant 0 : index
    %c0_51 = arith.constant 0 : index
    %330 = vector.load %arg2[%c3_49, %c0_50, %c0_51] : memref<8x2x8xf32, #tpu.memory_space<vmem>>, vector<1x2x8xf32>
    %331 = vector.shape_cast %330 : vector<1x2x8xf32> to vector<2x8xf32>
    %332 = vector.shape_cast %329 : vector<2x8xf32> to vector<1x2x8xf32>
    tpu.vector_store %arg2[%c3_49, %c0_50, %c0_51], %332 {strides = array<i32>} : memref<8x2x8xf32, #tpu.memory_space<vmem>>, vector<1x2x8xf32>,
    %333 = vector.extract_strided_slice %316 {offsets = [0, 32], sizes = [2, 8], strides = [1, 1]} : vector<2x64xf32> to vector<2x8xf32>
    %c4_52 = arith.constant 4 : index
    %c0_53 = arith.constant 0 : index
    %c0_54 = arith.constant 0 : index
    %334 = vector.load %arg2[%c4_52, %c0_53, %c0_54] : memref<8x2x8xf32, #tpu.memory_space<vmem>>, vector<1x2x8xf32>
    %335 = vector.shape_cast %334 : vector<1x2x8xf32> to vector<2x8xf32>
    %336 = vector.shape_cast %333 : vector<2x8xf32> to vector<1x2x8xf32>
    tpu.vector_store %arg2[%c4_52, %c0_53, %c0_54], %336 {strides = array<i32>} : memref<8x2x8xf32, #tpu.memory_space<vmem>>, vector<1x2x8xf32>,
    %337 = vector.extract_strided_slice %316 {offsets = [0, 40], sizes = [2, 8], strides = [1, 1]} : vector<2x64xf32> to vector<2x8xf32>
    %c5_55 = arith.constant 5 : index
    %c0_56 = arith.constant 0 : index
    %c0_57 = arith.constant 0 : index
    %338 = vector.load %arg2[%c5_55, %c0_56, %c0_57] : memref<8x2x8xf32, #tpu.memory_space<vmem>>, vector<1x2x8xf32>
    %339 = vector.shape_cast %338 : vector<1x2x8xf32> to vector<2x8xf32>
    %340 = vector.shape_cast %337 : vector<2x8xf32> to vector<1x2x8xf32>
    tpu.vector_store %arg2[%c5_55, %c0_56, %c0_57], %340 {strides = array<i32>} : memref<8x2x8xf32, #tpu.memory_space<vmem>>, vector<1x2x8xf32>,
    %341 = vector.extract_strided_slice %316 {offsets = [0, 48], sizes = [2, 8], strides = [1, 1]} : vector<2x64xf32> to vector<2x8xf32>
    %c6_58 = arith.constant 6 : index
    %c0_59 = arith.constant 0 : index
    %c0_60 = arith.constant 0 : index
    %342 = vector.load %arg2[%c6_58, %c0_59, %c0_60] : memref<8x2x8xf32, #tpu.memory_space<vmem>>, vector<1x2x8xf32>
    %343 = vector.shape_cast %342 : vector<1x2x8xf32> to vector<2x8xf32>
    %344 = vector.shape_cast %341 : vector<2x8xf32> to vector<1x2x8xf32>
    tpu.vector_store %arg2[%c6_58, %c0_59, %c0_60], %344 {strides = array<i32>} : memref<8x2x8xf32, #tpu.memory_space<vmem>>, vector<1x2x8xf32>,
    %345 = vector.extract_strided_slice %316 {offsets = [0, 56], sizes = [2, 8], strides = [1, 1]} : vector<2x64xf32> to vector<2x8xf32>
    %c7_61 = arith.constant 7 : index
    %c0_62 = arith.constant 0 : index
    %c0_63 = arith.constant 0 : index
    %346 = vector.load %arg2[%c7_61, %c0_62, %c0_63] : memref<8x2x8xf32, #tpu.memory_space<vmem>>, vector<1x2x8xf32>
    %347 = vector.shape_cast %346 : vector<1x2x8xf32> to vector<2x8xf32>
    %348 = vector.shape_cast %345 : vector<2x8xf32> to vector<1x2x8xf32>
    tpu.vector_store %arg2[%c7_61, %c0_62, %c0_63], %348 {strides = array<i32>} : memref<8x2x8xf32, #tpu.memory_space<vmem>>, vector<1x2x8xf32>,
    return
  }
}

</mosaic_0001>

<llo_original>
// kernel: tpu_custom_call.1
$region0: #{tpu_custom_call.1}
  #allocation0 [shape = 'u32[]', space=smem, size = 0x4, offset = 0x4, fixed_abs, tag = 'smem constant byte address 0x4 - core index']
  #allocation1 [shape = 'u32[72,128]{1,0:T(1,128)}', space=vmem, size = 0x9000, scoped, tag = 'internal scratch']
  %s0 = inlined_call_operand.vmem [shape: f32[8,2,16], index: 0, kind: input, shape index: {}]
  %s1 = inlined_call_operand.vmem [shape: f32[120,32], index: 1, kind: input, shape index: {}]
  %s2 = inlined_call_operand.hbm [shape: f32[8,2,8], index: 2, kind: output, shape index: {}]
  %s3 = sld [smem:[#allocation0]]
  $region18: #{tpu_custom_call.1} parent=0
    _
  %s5 = ssub.s32 1, %s3
  %s6 = scalar_select 0, %s5, %s3
  $region1: #{tpu_custom_call.1} parent=0
    #allocation2 [shape = 'u8[8192]{0}', space=vmem, size = 0x2000, scoped, tag = 'output window, operand 0, single buffered']
    #allocation3 [shape = 's32[1]{0}', space=sflag, size = 0x4, scoped, tag = 'scoped memory for tpu_custom_call.1']
    %7 = vsyncpa [#allocation3], 0
    // Predicated region
    $region2: #{tpu_custom_call.1} parent=1 // pred_check
      _
    $region3: #{tpu_custom_call.1} parent=1 // pred_check_branch
      %9 = sbr.rel (0) target = $region5
    $region4: #{tpu_custom_call.1} parent=1 // pred_region
      _
    $region5: #{tpu_custom_call.1} parent=1 // pred_fallthru
      _
    // Predicated region
    $region6: #{tpu_custom_call.1} parent=1 // pred_check
      _
    $region7: #{tpu_custom_call.1} parent=1 // pred_check_branch
      %11 = sbr.rel (0) target = $region9
    $region8: #{tpu_custom_call.1} parent=1 // pred_region
      _
    $region9: #{tpu_custom_call.1} parent=1 // pred_fallthru
      _
    %v12 = vld [vmem:[%s0] sm:$0x3]
    %s13 = scalar_lea.vmem %s0, 2
    %v14 = vld [vmem:[%s13] sm:$0x3]
    %s15 = scalar_lea.vmem %s0, 4
    %v16 = vld [vmem:[%s15] sm:$0x3]
    %s17 = scalar_lea.vmem %s0, 6
    %v18 = vld [vmem:[%s17] sm:$0x3]
    %s19 = scalar_lea.vmem %s0, 8
    %v20 = vld [vmem:[%s19] sm:$0x3]
    %s21 = scalar_lea.vmem %s0, 10
    %v22 = vld [vmem:[%s21] sm:$0x3]
    %s23 = scalar_lea.vmem %s0, 12
    %v24 = vld [vmem:[%s23] sm:$0x3]
    %s25 = scalar_lea.vmem %s0, 14
    %v26 = vld [vmem:[%s25] sm:$0x3]
    %28 = vrot.lane.b32.xlu0 %v14, 16
    %v29 = vpop.permute.xlu0 %28
    %32 = vrot.lane.b32.xlu0 %v16, 32
    %v33 = vpop.permute.xlu0 %32
    %36 = vrot.lane.b32.xlu0 %v18, 48
    %v37 = vpop.permute.xlu0 %36
    %40 = vrot.lane.b32.xlu0 %v20, 64
    %v41 = vpop.permute.xlu0 %40
    %44 = vrot.lane.b32.xlu0 %v22, 80
    %v45 = vpop.permute.xlu0 %44
    %48 = vrot.lane.b32.xlu0 %v24, 96
    %v49 = vpop.permute.xlu0 %48
    %52 = vrot.lane.b32.xlu0 %v26, 112
    %v53 = vpop.permute.xlu0 %52
    %vm55 = vcmask 130048
    %v56 = vsel %vm55, %v12, %v29
    %vm57 = vcmask 261120
    %v58 = vsel %vm57, %v56, %v33
    %vm59 = vcmask 392192
    %v60 = vsel %vm59, %v58, %v37
    %vm61 = vcmask 523264
    %v62 = vsel %vm61, %v60, %v41
    %vm63 = vcmask 654336
    %v64 = vsel %vm63, %v62, %v45
    %vm65 = vcmask 785408
    %v66 = vsel %vm65, %v64, %v49
    %vm67 = vcmask 916480
    %v68 = vsel %vm67, %v66, %v53
    %v69 = vld [vmem:[%s1] sm:$0xff]
    %v70 = vld [vmem:[%s1 + $0x8] sm:$0xff]
    %v72 = vrot.slane %v68, 6
    %73 = vrot.lane.b32.xlu0 %v72, 112
    %v74 = vpop.permute.xlu0 %73
    %v76 = vrot.slane %v68, 4
    %77 = vrot.lane.b32.xlu0 %v76, 96
    %v78 = vpop.permute.xlu0 %77
    %v80 = vrot.slane %v68, 2
    %81 = vrot.lane.b32.xlu0 %v80, 80
    %v82 = vpop.permute.xlu0 %81
    %84 = vrot.lane.b32.xlu0 %v68, 64
    %v85 = vpop.permute.xlu0 %84
    %87 = vrot.lane.b32.xlu0 %v72, 48
    %v88 = vpop.permute.xlu0 %87
    %90 = vrot.lane.b32.xlu0 %v76, 32
    %v91 = vpop.permute.xlu0 %90
    %93 = vrot.lane.b32.xlu0 %v80, 16
    %v94 = vpop.permute.xlu0 %93
    %vm96 = vcmask 1041408
    %v97 = vsel %vm96, %v68, %v74
    %vm98 = vcmask 1043456
    %v99 = vsel %vm98, %v97, %v78
    %vm100 = vcmask 1045504
    %v101 = vsel %vm100, %v99, %v82
    %v102 = vsel %vm96, %v85, %v88
    %v103 = vsel %vm98, %v102, %v91
    %v104 = vsel %vm100, %v103, %v94
    %v106 = vsel %vm55, %v101, 0
    %v109 = vsel %vm55, %v104, 0
    %111 = vmatpush.msra.mxu0 0.0
    %112 = vmatpush.msra.mxu0 0.0
    %113 = vmatpush.msra.mxu0 0.0
    %114 = vmatpush.msra.mxu0 0.0
    %115 = vmatpush.msra.mxu0 0.0
    %116 = vmatpush.msra.mxu0 0.0
    %117 = vmatpush.msra.mxu0 0.0
    %118 = vmatpush.msra.mxu0 0.0
    %119 = vmatpush.msra.mxu0 0.0
    %120 = vmatpush.msra.mxu0 0.0
    %121 = vmatpush.msra.mxu0 0.0
    %122 = vmatpush.msra.mxu0 0.0
    %123 = vmatpush.msra.mxu0 0.0
    %124 = vmatpush.msra.mxu0 0.0
    %125 = vmatpush.msra.mxu0 %v70
    %126 = vmatpush.msra.mxu0 %v69
    %127 = vmatmul.f32.gmra.mxu0 %v106
    %v128 = vpop.f32.mrf.mxu0
    %v129 = vadd.f32 0.0, %v128
    %130 = vmatmul.f32.gmra.mxu0 %v109
    %v131 = vpop.f32.mrf.mxu0
    %v132 = vadd.f32 0.0, %v131
    %133 = vdwg.mxu0
    %v135 = vrot.slane %v129, 2
    %136 = vrot.lane.b32.xlu0 %v135, 16
    %v137 = vpop.permute.xlu0 %136
    %v139 = vrot.slane %v129, 4
    %140 = vrot.lane.b32.xlu0 %v139, 32
    %v141 = vpop.permute.xlu0 %140
    %v143 = vrot.slane %v129, 6
    %144 = vrot.lane.b32.xlu0 %v143, 48
    %v145 = vpop.permute.xlu0 %144
    %148 = vrot.lane.b32.xlu0 %v132, 64
    %v149 = vpop.permute.xlu0 %148
    %v151 = vrot.slane %v132, 2
    %152 = vrot.lane.b32.xlu0 %v151, 80
    %v153 = vpop.permute.xlu0 %152
    %v155 = vrot.slane %v132, 4
    %156 = vrot.lane.b32.xlu0 %v155, 96
    %v157 = vpop.permute.xlu0 %156
    %v159 = vrot.slane %v132, 6
    %160 = vrot.lane.b32.xlu0 %v159, 112
    %v161 = vpop.permute.xlu0 %160
    %v163 = vsel %vm55, %v129, %v137
    %v164 = vsel %vm57, %v163, %v141
    %v165 = vsel %vm59, %v164, %v145
    %v166 = vsel %vm61, %v165, %v149
    %v167 = vsel %vm63, %v166, %v153
    %v168 = vsel %vm65, %v167, %v157
    %v169 = vsel %vm67, %v168, %v161
    %170 = vrot.lane.b32.xlu0 %v129, 112
    %v171 = vpop.permute.xlu0 %170
    %174 = vrot.lane.b32.xlu0 %v139, 16
    %v175 = vpop.permute.xlu0 %174
    %177 = vrot.lane.b32.xlu0 %v143, 32
    %v178 = vpop.permute.xlu0 %177
    %180 = vrot.lane.b32.xlu0 %v132, 48
    %v181 = vpop.permute.xlu0 %180
    %183 = vrot.lane.b32.xlu0 %v151, 64
    %v184 = vpop.permute.xlu0 %183
    %186 = vrot.lane.b32.xlu0 %v155, 80
    %v187 = vpop.permute.xlu0 %186
    %189 = vrot.lane.b32.xlu0 %v159, 96
    %v190 = vpop.permute.xlu0 %189
    %v192 = vsel %vm55, %v171, %v135
    %v193 = vsel %vm57, %v192, %v175
    %v194 = vsel %vm59, %v193, %v178
    %v195 = vsel %vm61, %v194, %v181
    %v196 = vsel %vm63, %v195, %v184
    %v197 = vsel %vm65, %v196, %v187
    %v198 = vsel %vm67, %v197, %v190
    %v200 = vrot.slane %v169, 6
    %v203 = vrot.slane %v198, 4
    %v205 = vsel %vm96, %v68, %v200
    %v206 = vsel %vm98, %v205, %v203
    %v207 = vld [vmem:[%s1 + $0x18] sm:$0xf]
    %v208 = vld [vmem:[%s1 + $0x20] sm:$0xf]
    %210 = vset.pattern.permute.xlu0 0
    %211 = vperm.xlu0 %210, %v207
    %v212 = vpop.permute.xlu0 %211
    %v214 = vperm.slane %v206, 0
    %v215 = vmul.f32 %v212, %v214
    %216 = vset.pattern.permute.xlu0 1
    %217 = vperm.xlu0 %216, %v207
    %v218 = vpop.permute.xlu0 %217
    %v220 = vperm.slane %v206, 1
    %v221 = vmul.f32 %v218, %v220
    %v222 = vadd.f32 %v215, %v221
    %223 = vset.pattern.permute.xlu0 2
    %224 = vperm.xlu0 %223, %v207
    %v225 = vpop.permute.xlu0 %224
    %v227 = vperm.slane %v206, 2
    %v228 = vmul.f32 %v225, %v227
    %v229 = vadd.f32 %v222, %v228
    %230 = vset.pattern.permute.xlu0 3
    %231 = vperm.xlu0 %230, %v207
    %v232 = vpop.permute.xlu0 %231
    %v234 = vperm.slane %v206, 3
    %v235 = vmul.f32 %v232, %v234
    %v236 = vadd.f32 %v229, %v235
    %237 = vset.pattern.permute.xlu0 4
    %238 = vperm.xlu0 %237, %v207
    %v239 = vpop.permute.xlu0 %238
    %v241 = vperm.slane %v206, 4
    %v242 = vmul.f32 %v239, %v241
    %v243 = vadd.f32 %v236, %v242
    %244 = vset.pattern.permute.xlu0 5
    %245 = vperm.xlu0 %244, %v207
    %v246 = vpop.permute.xlu0 %245
    %v248 = vperm.slane %v206, 5
    %v249 = vmul.f32 %v246, %v248
    %v250 = vadd.f32 %v243, %v249
    %252 = vset.pattern.permute.xlu0 0
    %253 = vperm.xlu0 %252, %v208
    %v254 = vpop.permute.xlu0 %253
    %v256 = vadd.f32 %v250, %v254
    %v257 = vtanh.pop %v256
    %v259 = vrot.slane %v257, 4
    %260 = vrot.lane.b32.xlu0 %v259, 112
    %v261 = vpop.permute.xlu0 %260
    %263 = vrot.lane.b32.xlu0 %v257, 96
    %v264 = vpop.permute.xlu0 %263
    %266 = vrot.lane.b32.xlu0 %v259, 80
    %v267 = vpop.permute.xlu0 %266
    %269 = vrot.lane.b32.xlu0 %v257, 64
    %v270 = vpop.permute.xlu0 %269
    %272 = vrot.lane.b32.xlu0 %v259, 48
    %v273 = vpop.permute.xlu0 %272
    %275 = vrot.lane.b32.xlu0 %v257, 32
    %v276 = vpop.permute.xlu0 %275
    %278 = vrot.lane.b32.xlu0 %v259, 16
    %v279 = vpop.permute.xlu0 %278
    %v281 = vsel %vm98, %v257, %v261
    %v282 = vsel %vm98, %v264, %v267
    %v283 = vsel %vm98, %v270, %v273
    %v284 = vsel %vm98, %v276, %v279
    %v286 = vsel %vm55, %v281, 0
    %v289 = vsel %vm55, %v282, 0
    %v292 = vsel %vm55, %v283, 0
    %v295 = vsel %vm55, %v284, 0
    %297 = vmatpush.msra.mxu0 0.0
    %298 = vmatpush.msra.mxu0 0.0
    %299 = vmatpush.msra.mxu0 0.0
    %300 = vmatpush.msra.mxu0 0.0
    %301 = vmatpush.msra.mxu0 0.0
    %302 = vmatpush.msra.mxu0 0.0
    %303 = vmatpush.msra.mxu0 0.0
    %304 = vmatpush.msra.mxu0 0.0
    %305 = vmatpush.msra.mxu0 0.0
    %306 = vmatpush.msra.mxu0 0.0
    %307 = vmatpush.msra.mxu0 0.0
    %308 = vmatpush.msra.mxu0 0.0
    %309 = vmatpush.msra.mxu0 0.0
    %310 = vmatpush.msra.mxu0 0.0
    %311 = vmatpush.msra.mxu0 %v70
    %312 = vmatpush.msra.mxu0 %v69
    %313 = vmatmul.f32.gmra.mxu0 %v286
    %v314 = vpop.f32.mrf.mxu0
    %v315 = vadd.f32 0.0, %v314
    %316 = vmatmul.f32.gmra.mxu0 %v289
    %v317 = vpop.f32.mrf.mxu0
    %v318 = vadd.f32 0.0, %v317
    %319 = vmatmul.f32.gmra.mxu0 %v292
    %v320 = vpop.f32.mrf.mxu0
    %v321 = vadd.f32 0.0, %v320
    %322 = vmatmul.f32.gmra.mxu0 %v295
    %v323 = vpop.f32.mrf.mxu0
    %v324 = vadd.f32 0.0, %v323
    %325 = vdwg.mxu0
    %v327 = vrot.slane %v315, 4
    %328 = vrot.lane.b32.xlu0 %v327, 16
    %v329 = vpop.permute.xlu0 %328
    %332 = vrot.lane.b32.xlu0 %v318, 32
    %v333 = vpop.permute.xlu0 %332
    %v335 = vrot.slane %v318, 4
    %336 = vrot.lane.b32.xlu0 %v335, 48
    %v337 = vpop.permute.xlu0 %336
    %340 = vrot.lane.b32.xlu0 %v321, 64
    %v341 = vpop.permute.xlu0 %340
    %v343 = vrot.slane %v321, 4
    %344 = vrot.lane.b32.xlu0 %v343, 80
    %v345 = vpop.permute.xlu0 %344
    %348 = vrot.lane.b32.xlu0 %v324, 96
    %v349 = vpop.permute.xlu0 %348
    %v351 = vrot.slane %v324, 4
    %352 = vrot.lane.b32.xlu0 %v351, 112
    %v353 = vpop.permute.xlu0 %352
    %v355 = vsel %vm55, %v315, %v329
    %v356 = vsel %vm57, %v355, %v333
    %v357 = vsel %vm59, %v356, %v337
    %v358 = vsel %vm61, %v357, %v341
    %v359 = vsel %vm63, %v358, %v345
    %v360 = vsel %vm65, %v359, %v349
    %v361 = vsel %vm67, %v360, %v353
    %362 = vrot.lane.b32.xlu0 %v315, 112
    %v363 = vpop.permute.xlu0 %362
    %366 = vrot.lane.b32.xlu0 %v318, 16
    %v367 = vpop.permute.xlu0 %366
    %369 = vrot.lane.b32.xlu0 %v335, 32
    %v370 = vpop.permute.xlu0 %369
    %372 = vrot.lane.b32.xlu0 %v321, 48
    %v373 = vpop.permute.xlu0 %372
    %375 = vrot.lane.b32.xlu0 %v343, 64
    %v376 = vpop.permute.xlu0 %375
    %378 = vrot.lane.b32.xlu0 %v324, 80
    %v379 = vpop.permute.xlu0 %378
    %381 = vrot.lane.b32.xlu0 %v351, 96
    %v382 = vpop.permute.xlu0 %381
    %v384 = vsel %vm55, %v363, %v327
    %v385 = vsel %vm57, %v384, %v367
    %v386 = vsel %vm59, %v385, %v370
    %v387 = vsel %vm61, %v386, %v373
    %v388 = vsel %vm63, %v387, %v376
    %v389 = vsel %vm65, %v388, %v379
    %v390 = vsel %vm67, %v389, %v382
    %v392 = vrot.slane %v361, 4
    %v394 = vsel %vm98, %v257, %v392
    %v395 = vld [vmem:[%s1 + $0x28] sm:$0xff]
    %v396 = vld [vmem:[%s1 + $0x30] sm:$0xff]
    %398 = vset.pattern.permute.xlu0 0
    %399 = vperm.xlu0 %398, %v396
    %v400 = vpop.permute.xlu0 %399
    %vm402 = vcmask 97280
    %v404 = vsel %vm402, %v395, 0
    %v407 = vsel %vm98, %v390, 0
    %409 = vmatpush.msra.mxu0 0.0
    %410 = vmatpush.msra.mxu0 0.0
    %411 = vmatpush.msra.mxu0 0.0
    %412 = vmatpush.msra.mxu0 0.0
    %413 = vmatpush.msra.mxu0 0.0
    %414 = vmatpush.msra.mxu0 0.0
    %415 = vmatpush.msra.mxu0 0.0
    %416 = vmatpush.msra.mxu0 0.0
    %417 = vmatpush.msra.mxu0 0.0
    %418 = vmatpush.msra.mxu0 0.0
    %419 = vmatpush.msra.mxu0 0.0
    %420 = vmatpush.msra.mxu0 0.0
    %421 = vmatpush.msra.mxu0 0.0
    %422 = vmatpush.msra.mxu0 0.0
    %423 = vmatpush.msra.mxu0 %v407
    %424 = vmatpush.msra.mxu0 %v394
    %425 = vmatmul.f32.gmra.mxu0 %v404
    %v426 = vpop.f32.mrf.mxu0
    %v427 = vadd.f32 %v400, %v426
    %428 = vdwg.mxu0
    %v429 = vtanh.pop %v427
    %430 = vxpose.xlu0.b32.start [1/16] %v429, 128
    %431 = vxpose.xlu0.b32.cont [2/16] 0.0, 128
    %432 = vxpose.xlu0.b32.cont [3/16] 0.0, 128
    %433 = vxpose.xlu0.b32.cont [4/16] 0.0, 128
    %434 = vxpose.xlu0.b32.cont [5/16] 0.0, 128
    %435 = vxpose.xlu0.b32.cont [6/16] 0.0, 128
    %436 = vxpose.xlu0.b32.cont [7/16] 0.0, 128
    %437 = vxpose.xlu0.b32.cont [8/16] 0.0, 128
    %438 = vxpose.xlu0.b32.cont [9/16] 0.0, 128
    %439 = vxpose.xlu0.b32.cont [10/16] 0.0, 128
    %440 = vxpose.xlu0.b32.cont [11/16] 0.0, 128
    %441 = vxpose.xlu0.b32.cont [12/16] 0.0, 128
    %442 = vxpose.xlu0.b32.cont [13/16] 0.0, 128
    %443 = vxpose.xlu0.b32.cont [14/16] 0.0, 128
    %444 = vxpose.xlu0.b32.cont [15/16] 0.0, 128
    %445 = vxpose.xlu0.b32.end [16/16] 0.0, 128
    %v446 = vpop.trf.xlu0
    %v447 = vpop.trf.xlu0
    %v448 = vpop.trf.xlu0
    %v449 = vpop.trf.xlu0
    %v450 = vpop.trf.xlu0
    %v451 = vpop.trf.xlu0
    %v452 = vpop.trf.xlu0
    %v453 = vpop.trf.xlu0
    %v454 = vpop.trf.xlu0
    %v455 = vpop.trf.xlu0
    %v456 = vpop.trf.xlu0
    %v457 = vpop.trf.xlu0
    %v458 = vpop.trf.xlu0
    %v459 = vpop.trf.xlu0
    %v460 = vpop.trf.xlu0
    %v461 = vpop.trf.xlu0
    %464 = vrot.lane.b32.xlu0 %v448, 8
    %v465 = vpop.permute.xlu0 %464
    %466 = vrot.lane.b32.xlu0 %v449, 8
    %v467 = vpop.permute.xlu0 %466
    %472 = vrot.lane.b32.xlu0 %v450, 16
    %v473 = vpop.permute.xlu0 %472
    %474 = vrot.lane.b32.xlu0 %v451, 16
    %v475 = vpop.permute.xlu0 %474
    %480 = vrot.lane.b32.xlu0 %v452, 24
    %v481 = vpop.permute.xlu0 %480
    %482 = vrot.lane.b32.xlu0 %v453, 24
    %v483 = vpop.permute.xlu0 %482
    %488 = vrot.lane.b32.xlu0 %v454, 32
    %v489 = vpop.permute.xlu0 %488
    %490 = vrot.lane.b32.xlu0 %v455, 32
    %v491 = vpop.permute.xlu0 %490
    %496 = vrot.lane.b32.xlu0 %v456, 40
    %v497 = vpop.permute.xlu0 %496
    %498 = vrot.lane.b32.xlu0 %v457, 40
    %v499 = vpop.permute.xlu0 %498
    %504 = vrot.lane.b32.xlu0 %v458, 48
    %v505 = vpop.permute.xlu0 %504
    %506 = vrot.lane.b32.xlu0 %v459, 48
    %v507 = vpop.permute.xlu0 %506
    %512 = vrot.lane.b32.xlu0 %v460, 56
    %v513 = vpop.permute.xlu0 %512
    %514 = vrot.lane.b32.xlu0 %v461, 56
    %v515 = vpop.permute.xlu0 %514
    %vm518 = vcmask 64512
    %v519 = vsel %vm518, %v446, %v465
    %v520 = vsel %vm518, %v447, %v467
    %v521 = vsel %vm55, %v519, %v473
    %v522 = vsel %vm55, %v520, %v475
    %vm523 = vcmask 195584
    %v524 = vsel %vm523, %v521, %v481
    %v525 = vsel %vm523, %v522, %v483
    %v526 = vsel %vm57, %v524, %v489
    %v527 = vsel %vm57, %v525, %v491
    %vm528 = vcmask 326656
    %v529 = vsel %vm528, %v526, %v497
    %v530 = vsel %vm528, %v527, %v499
    %v531 = vsel %vm59, %v529, %v505
    %v532 = vsel %vm59, %v530, %v507
    %vm533 = vcmask 457728
    %v534 = vsel %vm533, %v531, %v513
    %v535 = vsel %vm533, %v532, %v515
    %v536 = vld [vmem:[%s1 + $0x10] sm:$0xff]
    %539 = vrot.lane.b32.xlu0 %v534, 120
    %v540 = vpop.permute.xlu0 %539
    %541 = vrot.lane.b32.xlu0 %v535, 120
    %v542 = vpop.permute.xlu0 %541
    %543 = vrot.lane.b32.xlu0 %v534, 112
    %v544 = vpop.permute.xlu0 %543
    %545 = vrot.lane.b32.xlu0 %v535, 112
    %v546 = vpop.permute.xlu0 %545
    %547 = vrot.lane.b32.xlu0 %v534, 104
    %v548 = vpop.permute.xlu0 %547
    %549 = vrot.lane.b32.xlu0 %v535, 104
    %v550 = vpop.permute.xlu0 %549
    %551 = vrot.lane.b32.xlu0 %v534, 96
    %v552 = vpop.permute.xlu0 %551
    %553 = vrot.lane.b32.xlu0 %v535, 96
    %v554 = vpop.permute.xlu0 %553
    %555 = vrot.lane.b32.xlu0 %v534, 88
    %v556 = vpop.permute.xlu0 %555
    %557 = vrot.lane.b32.xlu0 %v535, 88
    %v558 = vpop.permute.xlu0 %557
    %559 = vrot.lane.b32.xlu0 %v534, 80
    %v560 = vpop.permute.xlu0 %559
    %561 = vrot.lane.b32.xlu0 %v535, 80
    %v562 = vpop.permute.xlu0 %561
    %563 = vrot.lane.b32.xlu0 %v534, 72
    %v564 = vpop.permute.xlu0 %563
    %565 = vrot.lane.b32.xlu0 %v535, 72
    %v566 = vpop.permute.xlu0 %565
    %v567 = vsel %vm518, %v534, 0
    %v569 = vsel %vm518, %v535, 0
    %v571 = vsel %vm518, %v540, 0
    %v573 = vsel %vm518, %v542, 0
    %v575 = vsel %vm518, %v544, 0
    %v577 = vsel %vm518, %v546, 0
    %v579 = vsel %vm518, %v548, 0
    %v581 = vsel %vm518, %v550, 0
    %v583 = vsel %vm518, %v552, 0
    %v585 = vsel %vm518, %v554, 0
    %v587 = vsel %vm518, %v556, 0
    %v589 = vsel %vm518, %v558, 0
    %v591 = vsel %vm518, %v560, 0
    %v593 = vsel %vm518, %v562, 0
    %v595 = vsel %vm518, %v564, 0
    %v597 = vsel %vm518, %v566, 0
    %599 = vmatpush.msra.mxu0 0.0
    %600 = vmatpush.msra.mxu0 0.0
    %601 = vmatpush.msra.mxu0 0.0
    %602 = vmatpush.msra.mxu0 0.0
    %603 = vmatpush.msra.mxu0 0.0
    %604 = vmatpush.msra.mxu0 0.0
    %605 = vmatpush.msra.mxu0 0.0
    %606 = vmatpush.msra.mxu0 0.0
    %607 = vmatpush.msra.mxu0 0.0
    %608 = vmatpush.msra.mxu0 0.0
    %609 = vmatpush.msra.mxu0 0.0
    %610 = vmatpush.msra.mxu0 0.0
    %611 = vmatpush.msra.mxu0 0.0
    %612 = vmatpush.msra.mxu0 0.0
    %613 = vmatpush.msra.mxu0 0.0
    %614 = vmatpush.msra.mxu0 %v536
    %615 = vmatmul.f32.gmra.mxu0 %v567
    %v616 = vpop.f32.mrf.mxu0
    %v617 = vadd.f32 0.0, %v616
    %618 = vmatmul.f32.gmra.mxu0 %v569
    %v619 = vpop.f32.mrf.mxu0
    %v620 = vadd.f32 0.0, %v619
    %621 = vmatmul.f32.gmra.mxu0 %v571
    %v622 = vpop.f32.mrf.mxu0
    %v623 = vadd.f32 0.0, %v622
    %624 = vmatmul.f32.gmra.mxu0 %v573
    %v625 = vpop.f32.mrf.mxu0
    %v626 = vadd.f32 0.0, %v625
    %627 = vmatmul.f32.gmra.mxu0 %v575
    %v628 = vpop.f32.mrf.mxu0
    %v629 = vadd.f32 0.0, %v628
    %630 = vmatmul.f32.gmra.mxu0 %v577
    %v631 = vpop.f32.mrf.mxu0
    %v632 = vadd.f32 0.0, %v631
    %633 = vmatmul.f32.gmra.mxu0 %v579
    %v634 = vpop.f32.mrf.mxu0
    %v635 = vadd.f32 0.0, %v634
    %636 = vmatmul.f32.gmra.mxu0 %v581
    %v637 = vpop.f32.mrf.mxu0
    %v638 = vadd.f32 0.0, %v637
    %639 = vmatmul.f32.gmra.mxu0 %v583
    %v640 = vpop.f32.mrf.mxu0
    %v641 = vadd.f32 0.0, %v640
    %642 = vmatmul.f32.gmra.mxu0 %v585
    %v643 = vpop.f32.mrf.mxu0
    %v644 = vadd.f32 0.0, %v643
    %645 = vmatmul.f32.gmra.mxu0 %v587
    %v646 = vpop.f32.mrf.mxu0
    %v647 = vadd.f32 0.0, %v646
    %648 = vmatmul.f32.gmra.mxu0 %v589
    %v649 = vpop.f32.mrf.mxu0
    %v650 = vadd.f32 0.0, %v649
    %651 = vmatmul.f32.gmra.mxu0 %v591
    %v652 = vpop.f32.mrf.mxu0
    %v653 = vadd.f32 0.0, %v652
    %654 = vmatmul.f32.gmra.mxu0 %v593
    %v655 = vpop.f32.mrf.mxu0
    %v656 = vadd.f32 0.0, %v655
    %657 = vmatmul.f32.gmra.mxu0 %v595
    %v658 = vpop.f32.mrf.mxu0
    %v659 = vadd.f32 0.0, %v658
    %660 = vmatmul.f32.gmra.mxu0 %v597
    %v661 = vpop.f32.mrf.mxu0
    %v662 = vadd.f32 0.0, %v661
    %663 = vdwg.mxu0
    %666 = vrot.lane.b32.xlu0 %v623, 8
    %v667 = vpop.permute.xlu0 %666
    %668 = vrot.lane.b32.xlu0 %v626, 8
    %v669 = vpop.permute.xlu0 %668
    %674 = vrot.lane.b32.xlu0 %v629, 16
    %v675 = vpop.permute.xlu0 %674
    %676 = vrot.lane.b32.xlu0 %v632, 16
    %v677 = vpop.permute.xlu0 %676
    %682 = vrot.lane.b32.xlu0 %v635, 24
    %v683 = vpop.permute.xlu0 %682
    %684 = vrot.lane.b32.xlu0 %v638, 24
    %v685 = vpop.permute.xlu0 %684
    %690 = vrot.lane.b32.xlu0 %v641, 32
    %v691 = vpop.permute.xlu0 %690
    %692 = vrot.lane.b32.xlu0 %v644, 32
    %v693 = vpop.permute.xlu0 %692
    %698 = vrot.lane.b32.xlu0 %v647, 40
    %v699 = vpop.permute.xlu0 %698
    %700 = vrot.lane.b32.xlu0 %v650, 40
    %v701 = vpop.permute.xlu0 %700
    %706 = vrot.lane.b32.xlu0 %v653, 48
    %v707 = vpop.permute.xlu0 %706
    %708 = vrot.lane.b32.xlu0 %v656, 48
    %v709 = vpop.permute.xlu0 %708
    %714 = vrot.lane.b32.xlu0 %v659, 56
    %v715 = vpop.permute.xlu0 %714
    %716 = vrot.lane.b32.xlu0 %v662, 56
    %v717 = vpop.permute.xlu0 %716
    %v720 = vsel %vm518, %v617, %v667
    %v721 = vsel %vm518, %v620, %v669
    %v722 = vsel %vm55, %v720, %v675
    %v723 = vsel %vm55, %v721, %v677
    %v724 = vsel %vm523, %v722, %v683
    %v725 = vsel %vm523, %v723, %v685
    %v726 = vsel %vm57, %v724, %v691
    %v727 = vsel %vm57, %v725, %v693
    %v728 = vsel %vm528, %v726, %v699
    %v729 = vsel %vm528, %v727, %v701
    %v730 = vsel %vm59, %v728, %v707
    %v731 = vsel %vm59, %v729, %v709
    %v732 = vsel %vm533, %v730, %v715
    %v733 = vsel %vm533, %v731, %v717
    %v734 = vld [vmem:[%s1 + $0x38] sm:$0xf]
    %v735 = vld [vmem:[%s1 + $0x40] sm:$0xf]
    %737 = vset.pattern.permute.xlu0 0
    %738 = vperm.xlu0 %737, %v735
    %v739 = vpop.permute.xlu0 %738
    %v742 = vsel %vm57, %v734, 0
    %744 = vmatpush.msra.mxu0 0.0
    %745 = vmatpush.msra.mxu0 0.0
    %746 = vmatpush.msra.mxu0 0.0
    %747 = vmatpush.msra.mxu0 0.0
    %748 = vmatpush.msra.mxu0 0.0
    %749 = vmatpush.msra.mxu0 0.0
    %750 = vmatpush.msra.mxu0 0.0
    %751 = vmatpush.msra.mxu0 0.0
    %752 = vmatpush.msra.mxu0 0.0
    %753 = vmatpush.msra.mxu0 0.0
    %754 = vmatpush.msra.mxu0 0.0
    %755 = vmatpush.msra.mxu0 0.0
    %756 = vmatpush.msra.mxu0 %v733
    %757 = vmatpush.msra.mxu0 %v732
    %758 = vmatpush.msra.mxu0 %v535
    %759 = vmatpush.msra.mxu0 %v534
    %760 = vmatmul.f32.gmra.mxu0 %v742
    %v761 = vpop.f32.mrf.mxu0
    %v762 = vadd.f32 %v739, %v761
    %763 = vdwg.mxu0
    %v764 = vtanh.pop %v762
    %v766 = vrot.slane %v764, 4
    %767 = vrot.lane.b32.xlu0 %v766, 120
    %v768 = vpop.permute.xlu0 %767
    %770 = vrot.lane.b32.xlu0 %v764, 112
    %v771 = vpop.permute.xlu0 %770
    %773 = vrot.lane.b32.xlu0 %v766, 104
    %v774 = vpop.permute.xlu0 %773
    %776 = vrot.lane.b32.xlu0 %v764, 96
    %v777 = vpop.permute.xlu0 %776
    %779 = vrot.lane.b32.xlu0 %v766, 88
    %v780 = vpop.permute.xlu0 %779
    %782 = vrot.lane.b32.xlu0 %v764, 80
    %v783 = vpop.permute.xlu0 %782
    %785 = vrot.lane.b32.xlu0 %v766, 72
    %v786 = vpop.permute.xlu0 %785
    %v788 = vsel %vm98, %v764, %v768
    %v789 = vsel %vm98, %v771, %v774
    %v790 = vsel %vm98, %v777, %v780
    %v791 = vsel %vm98, %v783, %v786
    %v793 = vsel %vm518, %v788, 0
    %v796 = vsel %vm518, %v789, 0
    %v799 = vsel %vm518, %v790, 0
    %v802 = vsel %vm518, %v791, 0
    %804 = vmatpush.msra.mxu0 0.0
    %805 = vmatpush.msra.mxu0 0.0
    %806 = vmatpush.msra.mxu0 0.0
    %807 = vmatpush.msra.mxu0 0.0
    %808 = vmatpush.msra.mxu0 0.0
    %809 = vmatpush.msra.mxu0 0.0
    %810 = vmatpush.msra.mxu0 0.0
    %811 = vmatpush.msra.mxu0 0.0
    %812 = vmatpush.msra.mxu0 0.0
    %813 = vmatpush.msra.mxu0 0.0
    %814 = vmatpush.msra.mxu0 0.0
    %815 = vmatpush.msra.mxu0 0.0
    %816 = vmatpush.msra.mxu0 0.0
    %817 = vmatpush.msra.mxu0 0.0
    %818 = vmatpush.msra.mxu0 0.0
    %819 = vmatpush.msra.mxu0 %v536
    %820 = vmatmul.f32.gmra.mxu0 %v793
    %v821 = vpop.f32.mrf.mxu0
    %v822 = vadd.f32 0.0, %v821
    %823 = vmatmul.f32.gmra.mxu0 %v796
    %v824 = vpop.f32.mrf.mxu0
    %v825 = vadd.f32 0.0, %v824
    %826 = vmatmul.f32.gmra.mxu0 %v799
    %v827 = vpop.f32.mrf.mxu0
    %v828 = vadd.f32 0.0, %v827
    %829 = vmatmul.f32.gmra.mxu0 %v802
    %v830 = vpop.f32.mrf.mxu0
    %v831 = vadd.f32 0.0, %v830
    %832 = vdwg.mxu0
    %v834 = vrot.slane %v822, 4
    %835 = vrot.lane.b32.xlu0 %v834, 8
    %v836 = vpop.permute.xlu0 %835
    %839 = vrot.lane.b32.xlu0 %v825, 16
    %v840 = vpop.permute.xlu0 %839
    %v842 = vrot.slane %v825, 4
    %843 = vrot.lane.b32.xlu0 %v842, 24
    %v844 = vpop.permute.xlu0 %843
    %847 = vrot.lane.b32.xlu0 %v828, 32
    %v848 = vpop.permute.xlu0 %847
    %v850 = vrot.slane %v828, 4
    %851 = vrot.lane.b32.xlu0 %v850, 40
    %v852 = vpop.permute.xlu0 %851
    %855 = vrot.lane.b32.xlu0 %v831, 48
    %v856 = vpop.permute.xlu0 %855
    %v858 = vrot.slane %v831, 4
    %859 = vrot.lane.b32.xlu0 %v858, 56
    %v860 = vpop.permute.xlu0 %859
    %v862 = vsel %vm518, %v822, %v836
    %v863 = vsel %vm55, %v862, %v840
    %v864 = vsel %vm523, %v863, %v844
    %v865 = vsel %vm57, %v864, %v848
    %v866 = vsel %vm528, %v865, %v852
    %v867 = vsel %vm59, %v866, %v856
    %v868 = vsel %vm533, %v867, %v860
    %v870 = vrot.slane %v868, 4
    %v872 = vsel %vm98, %v764, %v870
    %v873 = vld [vmem:[%s1 + $0x48] sm:$0xf]
    %v874 = vld [vmem:[%s1 + $0x50] sm:$0xf]
    %876 = vset.pattern.permute.xlu0 0
    %877 = vperm.xlu0 %876, %v873
    %v878 = vpop.permute.xlu0 %877
    %v880 = vperm.slane %v872, 0
    %v881 = vmul.f32 %v878, %v880
    %882 = vset.pattern.permute.xlu0 1
    %883 = vperm.xlu0 %882, %v873
    %v884 = vpop.permute.xlu0 %883
    %v886 = vperm.slane %v872, 1
    %v887 = vmul.f32 %v884, %v886
    %v888 = vadd.f32 %v881, %v887
    %889 = vset.pattern.permute.xlu0 2
    %890 = vperm.xlu0 %889, %v873
    %v891 = vpop.permute.xlu0 %890
    %v893 = vperm.slane %v872, 2
    %v894 = vmul.f32 %v891, %v893
    %v895 = vadd.f32 %v888, %v894
    %896 = vset.pattern.permute.xlu0 3
    %897 = vperm.xlu0 %896, %v873
    %v898 = vpop.permute.xlu0 %897
    %v900 = vperm.slane %v872, 3
    %v901 = vmul.f32 %v898, %v900
    %v902 = vadd.f32 %v895, %v901
    %903 = vset.pattern.permute.xlu0 4
    %904 = vperm.xlu0 %903, %v873
    %v905 = vpop.permute.xlu0 %904
    %v907 = vperm.slane %v872, 4
    %v908 = vmul.f32 %v905, %v907
    %v909 = vadd.f32 %v902, %v908
    %910 = vset.pattern.permute.xlu0 5
    %911 = vperm.xlu0 %910, %v873
    %v912 = vpop.permute.xlu0 %911
    %v914 = vperm.slane %v872, 5
    %v915 = vmul.f32 %v912, %v914
    %v916 = vadd.f32 %v909, %v915
    %917 = vset.pattern.permute.xlu0 6
    %918 = vperm.xlu0 %917, %v873
    %v919 = vpop.permute.xlu0 %918
    %v921 = vperm.slane %v872, 6
    %v922 = vmul.f32 %v919, %v921
    %v923 = vadd.f32 %v916, %v922
    %924 = vset.pattern.permute.xlu0 7
    %925 = vperm.xlu0 %924, %v873
    %v926 = vpop.permute.xlu0 %925
    %v928 = vperm.slane %v872, 7
    %v929 = vmul.f32 %v926, %v928
    %v930 = vadd.f32 %v923, %v929
    %932 = vset.pattern.permute.xlu0 0
    %933 = vperm.xlu0 %932, %v874
    %v934 = vpop.permute.xlu0 %933
    %v936 = vadd.f32 %v930, %v934
    %v937 = vtanh.pop %v936
    %v938 = vld [vmem:[%s1 + $0x58] sm:$0xff]
    %v939 = vld [vmem:[%s1 + $0x60] sm:$0xff]
    %941 = vset.pattern.permute.xlu0 0
    %942 = vperm.xlu0 %941, %v938
    %v943 = vpop.permute.xlu0 %942
    %v945 = vperm.slane %v937, 0
    %v946 = vmul.f32 %v943, %v945
    %947 = vset.pattern.permute.xlu0 1
    %948 = vperm.xlu0 %947, %v938
    %v949 = vpop.permute.xlu0 %948
    %v951 = vperm.slane %v937, 1
    %v952 = vmul.f32 %v949, %v951
    %v953 = vadd.f32 %v946, %v952
    %954 = vset.pattern.permute.xlu0 2
    %955 = vperm.xlu0 %954, %v938
    %v956 = vpop.permute.xlu0 %955
    %v958 = vperm.slane %v937, 2
    %v959 = vmul.f32 %v956, %v958
    %v960 = vadd.f32 %v953, %v959
    %961 = vset.pattern.permute.xlu0 3
    %962 = vperm.xlu0 %961, %v938
    %v963 = vpop.permute.xlu0 %962
    %v965 = vperm.slane %v937, 3
    %v966 = vmul.f32 %v963, %v965
    %v967 = vadd.f32 %v960, %v966
    %969 = vset.pattern.permute.xlu0 0
    %970 = vperm.xlu0 %969, %v939
    %v971 = vpop.permute.xlu0 %970
    %v973 = vadd.f32 %v967, %v971
    %v974 = vtanh.pop %v973
    %v975 = vld [vmem:[%s1 + $0x68] sm:$0x3]
    %v976 = vld [vmem:[%s1 + $0x70] sm:$0x3]
    %978 = vset.pattern.permute.xlu0 0
    %979 = vperm.xlu0 %978, %v975
    %v980 = vpop.permute.xlu0 %979
    %v982 = vperm.slane %v974, 0
    %v983 = vmul.f32 %v980, %v982
    %984 = vset.pattern.permute.xlu0 1
    %985 = vperm.xlu0 %984, %v975
    %v986 = vpop.permute.xlu0 %985
    %v988 = vperm.slane %v974, 1
    %v989 = vmul.f32 %v986, %v988
    %v990 = vadd.f32 %v983, %v989
    %991 = vset.pattern.permute.xlu0 2
    %992 = vperm.xlu0 %991, %v975
    %v993 = vpop.permute.xlu0 %992
    %v995 = vperm.slane %v974, 2
    %v996 = vmul.f32 %v993, %v995
    %v997 = vadd.f32 %v990, %v996
    %998 = vset.pattern.permute.xlu0 3
    %999 = vperm.xlu0 %998, %v975
    %v1000 = vpop.permute.xlu0 %999
    %v1002 = vperm.slane %v974, 3
    %v1003 = vmul.f32 %v1000, %v1002
    %v1004 = vadd.f32 %v997, %v1003
    %1005 = vset.pattern.permute.xlu0 4
    %1006 = vperm.xlu0 %1005, %v975
    %v1007 = vpop.permute.xlu0 %1006
    %v1009 = vperm.slane %v974, 4
    %v1010 = vmul.f32 %v1007, %v1009
    %v1011 = vadd.f32 %v1004, %v1010
    %1012 = vset.pattern.permute.xlu0 5
    %1013 = vperm.xlu0 %1012, %v975
    %v1014 = vpop.permute.xlu0 %1013
    %v1016 = vperm.slane %v974, 5
    %v1017 = vmul.f32 %v1014, %v1016
    %v1018 = vadd.f32 %v1011, %v1017
    %1019 = vset.pattern.permute.xlu0 6
    %1020 = vperm.xlu0 %1019, %v975
    %v1021 = vpop.permute.xlu0 %1020
    %v1023 = vperm.slane %v974, 6
    %v1024 = vmul.f32 %v1021, %v1023
    %v1025 = vadd.f32 %v1018, %v1024
    %1026 = vset.pattern.permute.xlu0 7
    %1027 = vperm.xlu0 %1026, %v975
    %v1028 = vpop.permute.xlu0 %1027
    %v1030 = vperm.slane %v974, 7
    %v1031 = vmul.f32 %v1028, %v1030
    %v1032 = vadd.f32 %v1025, %v1031
    %1034 = vset.pattern.permute.xlu0 0
    %1035 = vperm.xlu0 %1034, %v976
    %v1036 = vpop.permute.xlu0 %1035
    %v1038 = vadd.f32 %v1032, %v1036
    %v1039 = vtanh.pop %v1038
    %vm1040 = vcmask 58368
    %1041 = vst.msk [vmem:[#allocation2] sm:$0x3] %vm1040, %v1039
    %1043 = vrot.lane.b32.xlu0 %v1039, 120
    %v1044 = vpop.permute.xlu0 %1043
    %s1046 = scalar_lea.vmem [#allocation2], 2
    %1047 = vst.msk [vmem:[%s1046] sm:$0x3] %vm1040, %v1044
    %1048 = vrot.lane.b32.xlu0 %v1039, 112
    %v1049 = vpop.permute.xlu0 %1048
    %s1051 = scalar_lea.vmem [#allocation2], 4
    %1052 = vst.msk [vmem:[%s1051] sm:$0x3] %vm1040, %v1049
    %1053 = vrot.lane.b32.xlu0 %v1039, 104
    %v1054 = vpop.permute.xlu0 %1053
    %s1056 = scalar_lea.vmem [#allocation2], 6
    %1057 = vst.msk [vmem:[%s1056] sm:$0x3] %vm1040, %v1054
    %1058 = vrot.lane.b32.xlu0 %v1039, 96
    %v1059 = vpop.permute.xlu0 %1058
    %s1061 = scalar_lea.vmem [#allocation2], 8
    %1062 = vst.msk [vmem:[%s1061] sm:$0x3] %vm1040, %v1059
    %1063 = vrot.lane.b32.xlu0 %v1039, 88
    %v1064 = vpop.permute.xlu0 %1063
    %s1066 = scalar_lea.vmem [#allocation2], 10
    %1067 = vst.msk [vmem:[%s1066] sm:$0x3] %vm1040, %v1064
    %1068 = vrot.lane.b32.xlu0 %v1039, 80
    %v1069 = vpop.permute.xlu0 %1068
    %s1071 = scalar_lea.vmem [#allocation2], 12
    %1072 = vst.msk [vmem:[%s1071] sm:$0x3] %vm1040, %v1069
    %1073 = vrot.lane.b32.xlu0 %v1039, 72
    %v1074 = vpop.permute.xlu0 %1073
    %s1076 = scalar_lea.vmem [#allocation2], 14
    %1077 = vst.msk [vmem:[%s1076] sm:$0x3] %vm1040, %v1074
    // Predicated region
    $region10: #{tpu_custom_call.1} parent=1 // pred_check
      _
    $region11: #{tpu_custom_call.1} parent=1 // pred_check_branch
      %1079 = sbr.rel (0) target = $region13
    $region12: #{tpu_custom_call.1} parent=1 // pred_region
      %1081 = vsyncadd [#allocation3], 0
      %s1082 = sshll.u32 [#allocation2], 4
      %s1083 = int_to_ptr.vmem [resolvable:$true] %s1082
      %s1084 = sshll.u32 %s2, 4
      %s1085 = int_to_ptr.hbm [resolvable:$true] %s1084
      %1090 = dma.vmem_to_hbm [thread:$0]  %s1083, 256, %s1085, [#allocation3], 32, 32, 2
    $region13: #{tpu_custom_call.1} parent=1 // pred_fallthru
      _
    // Predicated region
    $region14: #{tpu_custom_call.1} parent=1 // pred_check
      _
    $region15: #{tpu_custom_call.1} parent=1 // pred_check_branch
      %1092 = sbr.rel (0) target = $region17
    $region16: #{tpu_custom_call.1} parent=1 // pred_region
      %1094 = dma.done [#allocation3], 256
    $region17: #{tpu_custom_call.1} parent=1 // pred_fallthru
      _
    %1095 = vsyncpa [#allocation3], 1

</llo_original>
